<compile_context>
chip_gen: v6e
topology: v6e:2x2x1
jax: 0.10.0
libtpu: 0.0.40
codegen_flags: <defaults>
</compile_context>

<pallas_src>
import functools
import math

import jax
import jax.numpy as jnp
from jax.experimental import pallas as pl
from jax.experimental.pallas import tpu as pltpu


def _encoder_block_kernel(
    x_ref,
    wq_ref, bq_ref, wk_ref, bk_ref, wv_ref, bv_ref,
    wo_ref, bo_ref,
    w1_ref, b1_ref, w2_ref, b2_ref,
    g1_ref, be1_ref, g2_ref, be2_ref,
    o_ref,
    acc_ref,
    *, eps):
  h = pl.program_id(1)
  x = x_ref[0]                                    # (S, D) float32
  xb = x.astype(jnp.bfloat16)

  @pl.when(h == 0)
  def _init():
    acc_ref[...] = jnp.zeros_like(acc_ref)

  # Per-head projections: full-D contraction, bf16 operands, f32 accumulate.
  # (1/sqrt(head_dim) is folded into wq/bq by the wrapper.)
  q = jnp.dot(xb, wq_ref[0], preferred_element_type=jnp.float32) + bq_ref[0]
  k = jnp.dot(xb, wk_ref[0], preferred_element_type=jnp.float32) + bk_ref[0]
  v = jnp.dot(xb, wv_ref[0], preferred_element_type=jnp.float32) + bv_ref[0]

  # q @ k^T without an explicit transpose: contract the last dims.
  logits = jax.lax.dot_general(
      q.astype(jnp.bfloat16), k.astype(jnp.bfloat16),
      dimension_numbers=(((1,), (1,)), ((), ())),
      preferred_element_type=jnp.float32)         # (S, S) float32

  # softmax in f32, reciprocal on the EUP
  logits = logits - jnp.max(logits, axis=-1, keepdims=True)
  p = jnp.exp(logits)
  attn = p * pl.reciprocal(jnp.sum(p, axis=-1, keepdims=True), approx=True)

  vals = jnp.dot(attn.astype(jnp.bfloat16), v.astype(jnp.bfloat16),
                 preferred_element_type=jnp.float32)          # (S, hd)

  # Accumulate this head's slice of the output projection:
  #   attn_out = sum_h vals_h @ Wo[h*hd:(h+1)*hd, :]
  acc_ref[...] += jnp.dot(vals.astype(jnp.bfloat16), wo_ref[0],
                          preferred_element_type=jnp.float32)  # (S, D)

  @pl.when(h == pl.num_programs(1) - 1)
  def _finalize():
    attn_out = acc_ref[...] + bo_ref[0]

    # residual + LayerNorm 1 (f32)
    x1 = x + attn_out
    mu1 = jnp.mean(x1, axis=-1, keepdims=True)
    var1 = jnp.mean((x1 - mu1) ** 2, axis=-1, keepdims=True)
    x1n = (x1 - mu1) * jax.lax.rsqrt(var1 + eps) * g1_ref[0] + be1_ref[0]

    # feed-forward: bf16 matmuls, f32 accumulate / elementwise
    h1 = jnp.dot(x1n.astype(jnp.bfloat16), w1_ref[...],
                 preferred_element_type=jnp.float32) + b1_ref[0]
    h1 = jnp.maximum(h1, 0.0)
    ff = jnp.dot(h1.astype(jnp.bfloat16), w2_ref[...],
                 preferred_element_type=jnp.float32) + b2_ref[0]

    # residual + LayerNorm 2 (f32)
    x2 = x1n + ff
    mu2 = jnp.mean(x2, axis=-1, keepdims=True)
    var2 = jnp.mean((x2 - mu2) ** 2, axis=-1, keepdims=True)
    out = (x2 - mu2) * jax.lax.rsqrt(var2 + eps) * g2_ref[0] + be2_ref[0]
    o_ref[0] = out.astype(o_ref.dtype)


def encoder_block(x, params, *, num_heads, eps=1e-5):
  """x: (B, S, D) float32.  params: dict of weights (see init_params)."""
  B, S, D = x.shape
  F = params["w1"].shape[1]
  H = num_heads
  assert D % H == 0
  hd = D // H
  scale = 1.0 / math.sqrt(hd)
  bf16 = jnp.bfloat16

  # ---- one-time wrapper-side layout transforms (plain XLA, outside kernel) --
  # PyTorch qkv columns are per-head interleaved [q_h | k_h | v_h]; regroup to
  # per-head (H, D, hd) matrices so BlockSpec slices by head (no in-kernel
  # sub-lane slicing / concat). Fold the 1/sqrt(hd) scale into Wq / bq.
  wqkv = params["wqkv"].reshape(D, H, 3, hd)
  bqkv = params["bqkv"].reshape(1, H, 3, hd)
  wq3 = (jnp.transpose(wqkv[:, :, 0, :], (1, 0, 2)) * scale).astype(bf16)  # (H,D,hd)
  wk3 = jnp.transpose(wqkv[:, :, 1, :], (1, 0, 2)).astype(bf16)
  wv3 = jnp.transpose(wqkv[:, :, 2, :], (1, 0, 2)).astype(bf16)
  bq3 = jnp.transpose(bqkv[:, :, 0, :], (1, 0, 2)) * scale                 # (H,1,hd) f32
  bk3 = jnp.transpose(bqkv[:, :, 1, :], (1, 0, 2))
  bv3 = jnp.transpose(bqkv[:, :, 2, :], (1, 0, 2))
  wo3 = params["wo"].reshape(H, hd, D).astype(bf16)                        # (H,hd,D)
  w1 = params["w1"].astype(bf16)
  w2 = params["w2"].astype(bf16)

  # rough VMEM budget (double-buffered blocks + intermediates) with headroom
  est = (2 * 2 * S * D * 4                         # x + out blocks
         + 2 * 3 * (D * hd * 2 + hd * 4)           # per-head q/k/v weights+bias
         + 2 * (hd * D * 2)                        # per-head wo slice
         + 2 * (D * F * 2 + F * 4)                 # w1, b1
         + 2 * (F * D * 2 + D * 4)                 # w2, b2
         + 2 * 6 * D * 4                           # bo + layernorm params
         + S * D * 4                               # accumulator scratch
         + 4 * (S * S + 3 * S * hd + 2 * S * D + S * F) * 4)  # intermediates
  vmem_limit = int(min(100 * 2**20, max(32 * 2**20, 2 * est)))

  head_spec = lambda shape: pl.BlockSpec(shape, lambda b, h: (h, 0, 0))
  const_spec = lambda shape: pl.BlockSpec(shape, lambda b, h: (0,) * len(shape))

  kernel = functools.partial(_encoder_block_kernel, eps=eps)

  return pl.pallas_call(
      kernel,
      out_shape=jax.ShapeDtypeStruct((B, S, D), x.dtype),
      grid=(B, H),
      in_specs=[
          pl.BlockSpec((1, S, D), lambda b, h: (b, 0, 0)),   # x
          head_spec((1, D, hd)), head_spec((1, 1, hd)),      # wq (scaled), bq (scaled)
          head_spec((1, D, hd)), head_spec((1, 1, hd)),      # wk, bk
          head_spec((1, D, hd)), head_spec((1, 1, hd)),      # wv, bv
          head_spec((1, hd, D)), const_spec((1, D)),         # wo head slice, bo
          const_spec((D, F)), const_spec((1, F)),            # ffn linear 1
          const_spec((F, D)), const_spec((1, D)),            # ffn linear 2
          const_spec((1, D)), const_spec((1, D)),            # layernorm 1
          const_spec((1, D)), const_spec((1, D)),            # layernorm 2
      ],
      out_specs=pl.BlockSpec((1, S, D), lambda b, h: (b, 0, 0)),
      scratch_shapes=[pltpu.VMEM((S, D), jnp.float32)],
      compiler_params=pltpu.CompilerParams(
          dimension_semantics=("parallel", "arbitrary"),
          vmem_limit_bytes=vmem_limit),
  )(
      x,
      wq3, bq3, wk3, bk3, wv3, bv3,
      wo3, params["bo"],
      w1, params["b1"], w2, params["b2"],
      params["g1"], params["be1"], params["g2"], params["be2"],
  )


def init_params(key, input_dim, num_heads, dim_feedforward):
  """Deterministic xavier-uniform init (matches module __init__ shapes)."""
  def xavier(k, fan_in, fan_out):
    a = math.sqrt(6.0 / (fan_in + fan_out))
    return jax.random.uniform(k, (fan_in, fan_out), jnp.float32, -a, a)

  ks = jax.random.split(key, 4)
  D, F = input_dim, dim_feedforward
  return {
      "wqkv": xavier(ks[0], D, 3 * D), "bqkv": jnp.zeros((1, 3 * D), jnp.float32),
      "wo":   xavier(ks[1], D, D),     "bo":   jnp.zeros((1, D), jnp.float32),
      "w1":   xavier(ks[2], D, F),     "b1":   jnp.zeros((1, F), jnp.float32),
      "w2":   xavier(ks[3], F, D),     "b2":   jnp.zeros((1, D), jnp.float32),
      "g1":   jnp.ones((1, D), jnp.float32), "be1": jnp.zeros((1, D), jnp.float32),
      "g2":   jnp.ones((1, D), jnp.float32), "be2": jnp.zeros((1, D), jnp.float32),
  }


def encoder_block_ref(x, params, *, num_heads, eps=1e-5):
  """Pure-JAX f32 reference mirroring the PyTorch forward (dropout=0, no mask)."""
  B, S, D = x.shape
  hd = D // num_heads
  qkv = x @ params["wqkv"] + params["bqkv"][0]
  qkv = qkv.reshape(B, S, num_heads, 3 * hd).transpose(0, 2, 1, 3)
  q, k, v = jnp.split(qkv, 3, axis=-1)
  logits = jnp.einsum("bhqd,bhkd->bhqk", q, k) / math.sqrt(hd)
  attn = jax.nn.softmax(logits, axis=-1)
  vals = jnp.einsum("bhqk,bhkd->bhqd", attn, v)
  vals = vals.transpose(0, 2, 1, 3).reshape(B, S, D)
  o = vals @ params["wo"] + params["bo"][0]

  def ln(z, g, b):
    mu = jnp.mean(z, axis=-1, keepdims=True)
    var = jnp.mean((z - mu) ** 2, axis=-1, keepdims=True)
    return (z - mu) * jax.lax.rsqrt(var + eps) * g[0] + b[0]

  x1 = ln(x + o, params["g1"], params["be1"])
  ff = jnp.maximum(x1 @ params["w1"] + params["b1"][0], 0.0) @ params["w2"] + params["b2"][0]
  return ln(x1 + ff, params["g2"], params["be2"])


if __name__ == "__main__":
  # Small but lane-dense (D, F multiples of 128) per the performance review.
  B, S, D = 2, 16, 128          # batch, seq_len, input_dim
  num_heads = 4                 # head_dim = 32
  dim_feedforward = 256

  key = jax.random.PRNGKey(0)
  kx, kp = jax.random.split(key)
  x = jax.random.normal(kx, (B, S, D), dtype=jnp.float32)
  params = init_params(kp, D, num_heads, dim_feedforward)

  out = encoder_block(x, params, num_heads=num_heads)
  out = jax.block_until_ready(out)

  ref = encoder_block_ref(x, params, num_heads=num_heads)
  assert out.shape == (B, S, D)
  max_err = float(jnp.max(jnp.abs(out - ref)))
  # bf16 matmul operands (f32 accumulate) => looser tolerance than a pure-f32 path.
  assert jnp.allclose(out, ref, atol=5e-2, rtol=5e-2), (
      f"mismatch vs reference (max abs err {max_err})")

  print("KERNEL_OK")
</pallas_src>

<mosaic_0001>
module attributes {stable_mosaic.version = 11 : i64} {
  func.func @_encoder_block_kernel(%arg0: i32, %arg1: i32, %arg2: memref<1x16x128xf32, #tpu.memory_space<vmem>>, %arg3: memref<1x128x32xbf16, #tpu.memory_space<vmem>>, %arg4: memref<1x1x32xf32, #tpu.memory_space<vmem>>, %arg5: memref<1x128x32xbf16, #tpu.memory_space<vmem>>, %arg6: memref<1x1x32xf32, #tpu.memory_space<vmem>>, %arg7: memref<1x128x32xbf16, #tpu.memory_space<vmem>>, %arg8: memref<1x1x32xf32, #tpu.memory_space<vmem>>, %arg9: memref<1x32x128xbf16, #tpu.memory_space<vmem>>, %arg10: memref<1x128xf32, #tpu.memory_space<vmem>>, %arg11: memref<128x256xbf16, #tpu.memory_space<vmem>>, %arg12: memref<1x256xf32, #tpu.memory_space<vmem>>, %arg13: memref<256x128xbf16, #tpu.memory_space<vmem>>, %arg14: memref<1x128xf32, #tpu.memory_space<vmem>>, %arg15: memref<1x128xf32, #tpu.memory_space<vmem>>, %arg16: memref<1x128xf32, #tpu.memory_space<vmem>>, %arg17: memref<1x128xf32, #tpu.memory_space<vmem>>, %arg18: memref<1x128xf32, #tpu.memory_space<vmem>>, %arg19: memref<1x16x128xf32, #tpu.memory_space<vmem>>, %arg20: memref<16x128xf32, #tpu.memory_space<vmem>>) attributes {dimension_semantics = [#tpu.dimension_semantics<parallel>, #tpu.dimension_semantics<arbitrary>], iteration_bounds = array<i64: 2, 4>, scalar_prefetch = 0 : i64, scratch_operands = 1 : i64, tpu.core_type = #tpu.core_type<tc>, window_params = [{transform_indices = @transform_0, window_bounds = array<i64: 1, 16, 128>}, {transform_indices = @transform_1, window_bounds = array<i64: 1, 128, 32>}, {transform_indices = @transform_2, window_bounds = array<i64: 1, 1, 32>}, {transform_indices = @transform_3, window_bounds = array<i64: 1, 128, 32>}, {transform_indices = @transform_4, window_bounds = array<i64: 1, 1, 32>}, {transform_indices = @transform_5, window_bounds = array<i64: 1, 128, 32>}, {transform_indices = @transform_6, window_bounds = array<i64: 1, 1, 32>}, {transform_indices = @transform_7, window_bounds = array<i64: 1, 32, 128>}, {pipeline_mode = #tpu.pipeline_mode<synchronous>, transform_indices = @transform_8, window_bounds = array<i64: 1, 128>}, {pipeline_mode = #tpu.pipeline_mode<synchronous>, transform_indices = @transform_9, window_bounds = array<i64: 128, 256>}, {pipeline_mode = #tpu.pipeline_mode<synchronous>, transform_indices = @transform_10, window_bounds = array<i64: 1, 256>}, {pipeline_mode = #tpu.pipeline_mode<synchronous>, transform_indices = @transform_11, window_bounds = array<i64: 256, 128>}, {pipeline_mode = #tpu.pipeline_mode<synchronous>, transform_indices = @transform_12, window_bounds = array<i64: 1, 128>}, {pipeline_mode = #tpu.pipeline_mode<synchronous>, transform_indices = @transform_13, window_bounds = array<i64: 1, 128>}, {pipeline_mode = #tpu.pipeline_mode<synchronous>, transform_indices = @transform_14, window_bounds = array<i64: 1, 128>}, {pipeline_mode = #tpu.pipeline_mode<synchronous>, transform_indices = @transform_15, window_bounds = array<i64: 1, 128>}, {pipeline_mode = #tpu.pipeline_mode<synchronous>, transform_indices = @transform_16, window_bounds = array<i64: 1, 128>}, {transform_indices = @transform_17, window_bounds = array<i64: 1, 16, 128>}]} {
    %c0 = arith.constant 0 : index
    %c0_0 = arith.constant 0 : index
    %c0_1 = arith.constant 0 : index
    %0 = vector.load %arg2[%c0, %c0_0, %c0_1] : memref<1x16x128xf32, #tpu.memory_space<vmem>>, vector<1x16x128xf32>
    %1 = vector.shape_cast %0 : vector<1x16x128xf32> to vector<16x128xf32>
    %2 = arith.truncf %1 : vector<16x128xf32> to vector<16x128xbf16>
    %c0_i32 = arith.constant 0 : i32
    %3 = arith.cmpi eq, %arg1, %c0_i32 : i32
    %4 = arith.extui %3 : i1 to i32
    %c0_i32_2 = arith.constant 0 : i32
    %5 = arith.cmpi ne, %4, %c0_i32_2 : i32
    scf.if %5 {
      %cst_36 = arith.constant 0.000000e+00 : f32
      %53 = vector.broadcast %cst_36 : f32 to vector<16x128xf32>
      %c0_37 = arith.constant 0 : index
      %c0_38 = arith.constant 0 : index
      %54 = vector.load %arg20[%c0_37, %c0_38] : memref<16x128xf32, #tpu.memory_space<vmem>>, vector<16x128xf32>
      tpu.vector_store %arg20[%c0_37, %c0_38], %53 {strides = array<i32>} : memref<16x128xf32, #tpu.memory_space<vmem>>, vector<16x128xf32>,
    } else {
    }
    %c0_3 = arith.constant 0 : index
    %c0_4 = arith.constant 0 : index
    %c0_5 = arith.constant 0 : index
    %6 = vector.load %arg3[%c0_3, %c0_4, %c0_5] : memref<1x128x32xbf16, #tpu.memory_space<vmem>>, vector<1x128x32xbf16>
    %7 = vector.shape_cast %6 : vector<1x128x32xbf16> to vector<128x32xbf16>
    %cst = arith.constant dense<0.000000e+00> : vector<16x32xf32>
    %8 = tpu.matmul %2, %7, %cst {dimension_numbers = #tpu.dot_dimension_numbers<[1], [0], [0], [1], [0, 0, 1, 1], [], []>} : vector<16x128xbf16>, vector<128x32xbf16>, vector<16x32xf32> -> vector<16x32xf32>
    %c0_6 = arith.constant 0 : index
    %c0_7 = arith.constant 0 : index
    %c0_8 = arith.constant 0 : index
    %9 = vector.load %arg4[%c0_6, %c0_7, %c0_8] : memref<1x1x32xf32, #tpu.memory_space<vmem>>, vector<1x1x32xf32>
    %10 = vector.shape_cast %9 : vector<1x1x32xf32> to vector<1x32xf32>
    %11 = vector.broadcast %10 : vector<1x32xf32> to vector<16x32xf32>
    %12 = arith.addf %8, %11 : vector<16x32xf32>
    %c0_9 = arith.constant 0 : index
    %c0_10 = arith.constant 0 : index
    %c0_11 = arith.constant 0 : index
    %13 = vector.load %arg5[%c0_9, %c0_10, %c0_11] : memref<1x128x32xbf16, #tpu.memory_space<vmem>>, vector<1x128x32xbf16>
    %14 = vector.shape_cast %13 : vector<1x128x32xbf16> to vector<128x32xbf16>
    %cst_12 = arith.constant dense<0.000000e+00> : vector<16x32xf32>
    %15 = tpu.matmul %2, %14, %cst_12 {dimension_numbers = #tpu.dot_dimension_numbers<[1], [0], [0], [1], [0, 0, 1, 1], [], []>} : vector<16x128xbf16>, vector<128x32xbf16>, vector<16x32xf32> -> vector<16x32xf32>
    %c0_13 = arith.constant 0 : index
    %c0_14 = arith.constant 0 : index
    %c0_15 = arith.constant 0 : index
    %16 = vector.load %arg6[%c0_13, %c0_14, %c0_15] : memref<1x1x32xf32, #tpu.memory_space<vmem>>, vector<1x1x32xf32>
    %17 = vector.shape_cast %16 : vector<1x1x32xf32> to vector<1x32xf32>
    %18 = vector.broadcast %17 : vector<1x32xf32> to vector<16x32xf32>
    %19 = arith.addf %15, %18 : vector<16x32xf32>
    %c0_16 = arith.constant 0 : index
    %c0_17 = arith.constant 0 : index
    %c0_18 = arith.constant 0 : index
    %20 = vector.load %arg7[%c0_16, %c0_17, %c0_18] : memref<1x128x32xbf16, #tpu.memory_space<vmem>>, vector<1x128x32xbf16>
    %21 = vector.shape_cast %20 : vector<1x128x32xbf16> to vector<128x32xbf16>
    %cst_19 = arith.constant dense<0.000000e+00> : vector<16x32xf32>
    %22 = tpu.matmul %2, %21, %cst_19 {dimension_numbers = #tpu.dot_dimension_numbers<[1], [0], [0], [1], [0, 0, 1, 1], [], []>} : vector<16x128xbf16>, vector<128x32xbf16>, vector<16x32xf32> -> vector<16x32xf32>
    %c0_20 = arith.constant 0 : index
    %c0_21 = arith.constant 0 : index
    %c0_22 = arith.constant 0 : index
    %23 = vector.load %arg8[%c0_20, %c0_21, %c0_22] : memref<1x1x32xf32, #tpu.memory_space<vmem>>, vector<1x1x32xf32>
    %24 = vector.shape_cast %23 : vector<1x1x32xf32> to vector<1x32xf32>
    %25 = vector.broadcast %24 : vector<1x32xf32> to vector<16x32xf32>
    %26 = arith.addf %22, %25 : vector<16x32xf32>
    %27 = arith.truncf %12 : vector<16x32xf32> to vector<16x32xbf16>
    %28 = arith.truncf %19 : vector<16x32xf32> to vector<16x32xbf16>
    %cst_23 = arith.constant dense<0.000000e+00> : vector<16x16xf32>
    %29 = tpu.matmul %27, %28, %cst_23 {dimension_numbers = #tpu.dot_dimension_numbers<[1], [1], [0], [0], [0, 0, 1, 0], [], []>} : vector<16x32xbf16>, vector<16x32xbf16>, vector<16x16xf32> -> vector<16x16xf32>
    %cst_24 = arith.constant dense<0xFF800000> : vector<16xf32>
    %30 = vector.multi_reduction <maximumf>, %29, %cst_24 [1] : vector<16x16xf32> to vector<16xf32>
    %31 = vector.shape_cast %30 : vector<16xf32> to vector<16x1xf32>
    %32 = vector.broadcast %31 : vector<16x1xf32> to vector<16x16xf32>
    %33 = arith.subf %29, %32 : vector<16x16xf32>
    %34 = math.exp %33 : vector<16x16xf32>
    %cst_25 = arith.constant dense<0.000000e+00> : vector<16xf32>
    %35 = vector.multi_reduction <add>, %34, %cst_25 [1] : vector<16x16xf32> to vector<16xf32>
    %36 = vector.shape_cast %35 : vector<16xf32> to vector<16x1xf32>
    %37 = tpu.reciprocal %36 {approx = true} : vector<16x1xf32> -> vector<16x1xf32>
    %38 = vector.broadcast %37 : vector<16x1xf32> to vector<16x16xf32>
    %39 = arith.mulf %34, %38 : vector<16x16xf32>
    %40 = arith.truncf %39 : vector<16x16xf32> to vector<16x16xbf16>
    %41 = arith.truncf %26 : vector<16x32xf32> to vector<16x32xbf16>
    %cst_26 = arith.constant dense<0.000000e+00> : vector<16x32xf32>
    %42 = tpu.matmul %40, %41, %cst_26 {dimension_numbers = #tpu.dot_dimension_numbers<[1], [0], [0], [1], [0, 0, 1, 1], [], []>} : vector<16x16xbf16>, vector<16x32xbf16>, vector<16x32xf32> -> vector<16x32xf32>
    %c0_27 = arith.constant 0 : index
    %c0_28 = arith.constant 0 : index
    %43 = vector.load %arg20[%c0_27, %c0_28] : memref<16x128xf32, #tpu.memory_space<vmem>>, vector<16x128xf32>
    %44 = arith.truncf %42 : vector<16x32xf32> to vector<16x32xbf16>
    %c0_29 = arith.constant 0 : index
    %c0_30 = arith.constant 0 : index
    %c0_31 = arith.constant 0 : index
    %45 = vector.load %arg9[%c0_29, %c0_30, %c0_31] : memref<1x32x128xbf16, #tpu.memory_space<vmem>>, vector<1x32x128xbf16>
    %46 = vector.shape_cast %45 : vector<1x32x128xbf16> to vector<32x128xbf16>
    %cst_32 = arith.constant dense<0.000000e+00> : vector<16x128xf32>
    %47 = tpu.matmul %44, %46, %cst_32 {dimension_numbers = #tpu.dot_dimension_numbers<[1], [0], [0], [1], [0, 0, 1, 1], [], []>} : vector<16x32xbf16>, vector<32x128xbf16>, vector<16x128xf32> -> vector<16x128xf32>
    %48 = arith.addf %43, %47 : vector<16x128xf32>
    %c0_33 = arith.constant 0 : index
    %c0_34 = arith.constant 0 : index
    %49 = vector.load %arg20[%c0_33, %c0_34] : memref<16x128xf32, #tpu.memory_space<vmem>>, vector<16x128xf32>
    tpu.vector_store %arg20[%c0_33, %c0_34], %48 {strides = array<i32>} : memref<16x128xf32, #tpu.memory_space<vmem>>, vector<16x128xf32>,
    %c3_i32 = arith.constant 3 : i32
    %50 = arith.cmpi eq, %arg1, %c3_i32 : i32
    %51 = arith.extui %50 : i1 to i32
    %c0_i32_35 = arith.constant 0 : i32
    %52 = arith.cmpi ne, %51, %c0_i32_35 : i32
    scf.if %52 {
      %c0_36 = arith.constant 0 : index
      %c0_37 = arith.constant 0 : index
      %53 = vector.load %arg20[%c0_36, %c0_37] : memref<16x128xf32, #tpu.memory_space<vmem>>, vector<16x128xf32>
      %c0_38 = arith.constant 0 : index
      %c0_39 = arith.constant 0 : index
      %54 = vector.load %arg10[%c0_38, %c0_39] : memref<1x128xf32, #tpu.memory_space<vmem>>, vector<1x128xf32>
      %55 = vector.shape_cast %54 : vector<1x128xf32> to vector<128xf32>
      %56 = vector.shape_cast %55 : vector<128xf32> to vector<1x128xf32>
      %57 = vector.broadcast %56 : vector<1x128xf32> to vector<16x128xf32>
      %58 = arith.addf %53, %57 : vector<16x128xf32>
      %59 = arith.addf %1, %58 : vector<16x128xf32>
      %cst_40 = arith.constant dense<0.000000e+00> : vector<16xf32>
      %60 = vector.multi_reduction <add>, %59, %cst_40 [1] : vector<16x128xf32> to vector<16xf32>
      %61 = vector.shape_cast %60 : vector<16xf32> to vector<16x1xf32>
      %cst_41 = arith.constant 1.280000e+02 : f32
      %62 = vector.broadcast %cst_41 : f32 to vector<16x1xf32>
      %63 = arith.divf %61, %62 : vector<16x1xf32>
      %64 = vector.broadcast %63 : vector<16x1xf32> to vector<16x128xf32>
      %65 = arith.subf %59, %64 : vector<16x128xf32>
      %66 = arith.mulf %65, %65 : vector<16x128xf32>
      %cst_42 = arith.constant dense<0.000000e+00> : vector<16xf32>
      %67 = vector.multi_reduction <add>, %66, %cst_42 [1] : vector<16x128xf32> to vector<16xf32>
      %68 = vector.shape_cast %67 : vector<16xf32> to vector<16x1xf32>
      %cst_43 = arith.constant 1.280000e+02 : f32
      %69 = vector.broadcast %cst_43 : f32 to vector<16x1xf32>
      %70 = arith.divf %68, %69 : vector<16x1xf32>
      %71 = vector.broadcast %63 : vector<16x1xf32> to vector<16x128xf32>
      %72 = arith.subf %59, %71 : vector<16x128xf32>
      %cst_44 = arith.constant 9.99999974E-6 : f32
      %73 = vector.broadcast %cst_44 : f32 to vector<16x1xf32>
      %74 = arith.addf %70, %73 : vector<16x1xf32>
      %75 = math.rsqrt %74 : vector<16x1xf32>
      %76 = vector.broadcast %75 : vector<16x1xf32> to vector<16x128xf32>
      %77 = arith.mulf %72, %76 : vector<16x128xf32>
      %c0_45 = arith.constant 0 : index
      %c0_46 = arith.constant 0 : index
      %78 = vector.load %arg15[%c0_45, %c0_46] : memref<1x128xf32, #tpu.memory_space<vmem>>, vector<1x128xf32>
      %79 = vector.shape_cast %78 : vector<1x128xf32> to vector<128xf32>
      %80 = vector.shape_cast %79 : vector<128xf32> to vector<1x128xf32>
      %81 = vector.broadcast %80 : vector<1x128xf32> to vector<16x128xf32>
      %82 = arith.mulf %77, %81 : vector<16x128xf32>
      %c0_47 = arith.constant 0 : index
      %c0_48 = arith.constant 0 : index
      %83 = vector.load %arg16[%c0_47, %c0_48] : memref<1x128xf32, #tpu.memory_space<vmem>>, vector<1x128xf32>
      %84 = vector.shape_cast %83 : vector<1x128xf32> to vector<128xf32>
      %85 = vector.shape_cast %84 : vector<128xf32> to vector<1x128xf32>
      %86 = vector.broadcast %85 : vector<1x128xf32> to vector<16x128xf32>
      %87 = arith.addf %82, %86 : vector<16x128xf32>
      %88 = arith.truncf %87 : vector<16x128xf32> to vector<16x128xbf16>
      %c0_49 = arith.constant 0 : index
      %c0_50 = arith.constant 0 : index
      %89 = vector.load %arg11[%c0_49, %c0_50] : memref<128x256xbf16, #tpu.memory_space<vmem>>, vector<128x256xbf16>
      %cst_51 = arith.constant dense<0.000000e+00> : vector<16x256xf32>
      %90 = tpu.matmul %88, %89, %cst_51 {dimension_numbers = #tpu.dot_dimension_numbers<[1], [0], [0], [1], [0, 0, 1, 1], [], []>} : vector<16x128xbf16>, vector<128x256xbf16>, vector<16x256xf32> -> vector<16x256xf32>
      %c0_52 = arith.constant 0 : index
      %c0_53 = arith.constant 0 : index
      %91 = vector.load %arg12[%c0_52, %c0_53] : memref<1x256xf32, #tpu.memory_space<vmem>>, vector<1x256xf32>
      %92 = vector.shape_cast %91 : vector<1x256xf32> to vector<256xf32>
      %93 = vector.shape_cast %92 : vector<256xf32> to vector<1x256xf32>
      %94 = vector.broadcast %93 : vector<1x256xf32> to vector<16x256xf32>
      %95 = arith.addf %90, %94 : vector<16x256xf32>
      %cst_54 = arith.constant 0.000000e+00 : f32
      %96 = vector.broadcast %cst_54 : f32 to vector<16x256xf32>
      %97 = arith.maximumf %95, %96 : vector<16x256xf32>
      %98 = arith.truncf %97 : vector<16x256xf32> to vector<16x256xbf16>
      %c0_55 = arith.constant 0 : index
      %c0_56 = arith.constant 0 : index
      %99 = vector.load %arg13[%c0_55, %c0_56] : memref<256x128xbf16, #tpu.memory_space<vmem>>, vector<256x128xbf16>
      %cst_57 = arith.constant dense<0.000000e+00> : vector<16x128xf32>
      %100 = tpu.matmul %98, %99, %cst_57 {dimension_numbers = #tpu.dot_dimension_numbers<[1], [0], [0], [1], [0, 0, 1, 1], [], []>} : vector<16x256xbf16>, vector<256x128xbf16>, vector<16x128xf32> -> vector<16x128xf32>
      %c0_58 = arith.constant 0 : index
      %c0_59 = arith.constant 0 : index
      %101 = vector.load %arg14[%c0_58, %c0_59] : memref<1x128xf32, #tpu.memory_space<vmem>>, vector<1x128xf32>
      %102 = vector.shape_cast %101 : vector<1x128xf32> to vector<128xf32>
      %103 = vector.shape_cast %102 : vector<128xf32> to vector<1x128xf32>
      %104 = vector.broadcast %103 : vector<1x128xf32> to vector<16x128xf32>
      %105 = arith.addf %100, %104 : vector<16x128xf32>
      %106 = arith.addf %87, %105 : vector<16x128xf32>
      %cst_60 = arith.constant dense<0.000000e+00> : vector<16xf32>
      %107 = vector.multi_reduction <add>, %106, %cst_60 [1] : vector<16x128xf32> to vector<16xf32>
      %108 = vector.shape_cast %107 : vector<16xf32> to vector<16x1xf32>
      %cst_61 = arith.constant 1.280000e+02 : f32
      %109 = vector.broadcast %cst_61 : f32 to vector<16x1xf32>
      %110 = arith.divf %108, %109 : vector<16x1xf32>
      %111 = vector.broadcast %110 : vector<16x1xf32> to vector<16x128xf32>
      %112 = arith.subf %106, %111 : vector<16x128xf32>
      %113 = arith.mulf %112, %112 : vector<16x128xf32>
      %cst_62 = arith.constant dense<0.000000e+00> : vector<16xf32>
      %114 = vector.multi_reduction <add>, %113, %cst_62 [1] : vector<16x128xf32> to vector<16xf32>
      %115 = vector.shape_cast %114 : vector<16xf32> to vector<16x1xf32>
      %cst_63 = arith.constant 1.280000e+02 : f32
      %116 = vector.broadcast %cst_63 : f32 to vector<16x1xf32>
      %117 = arith.divf %115, %116 : vector<16x1xf32>
      %118 = vector.broadcast %110 : vector<16x1xf32> to vector<16x128xf32>
      %119 = arith.subf %106, %118 : vector<16x128xf32>
      %cst_64 = arith.constant 9.99999974E-6 : f32
      %120 = vector.broadcast %cst_64 : f32 to vector<16x1xf32>
      %121 = arith.addf %117, %120 : vector<16x1xf32>
      %122 = math.rsqrt %121 : vector<16x1xf32>
      %123 = vector.broadcast %122 : vector<16x1xf32> to vector<16x128xf32>
      %124 = arith.mulf %119, %123 : vector<16x128xf32>
      %c0_65 = arith.constant 0 : index
      %c0_66 = arith.constant 0 : index
      %125 = vector.load %arg17[%c0_65, %c0_66] : memref<1x128xf32, #tpu.memory_space<vmem>>, vector<1x128xf32>
      %126 = vector.shape_cast %125 : vector<1x128xf32> to vector<128xf32>
      %127 = vector.shape_cast %126 : vector<128xf32> to vector<1x128xf32>
      %128 = vector.broadcast %127 : vector<1x128xf32> to vector<16x128xf32>
      %129 = arith.mulf %124, %128 : vector<16x128xf32>
      %c0_67 = arith.constant 0 : index
      %c0_68 = arith.constant 0 : index
      %130 = vector.load %arg18[%c0_67, %c0_68] : memref<1x128xf32, #tpu.memory_space<vmem>>, vector<1x128xf32>
      %131 = vector.shape_cast %130 : vector<1x128xf32> to vector<128xf32>
      %132 = vector.shape_cast %131 : vector<128xf32> to vector<1x128xf32>
      %133 = vector.broadcast %132 : vector<1x128xf32> to vector<16x128xf32>
      %134 = arith.addf %129, %133 : vector<16x128xf32>
      %c0_69 = arith.constant 0 : index
      %c0_70 = arith.constant 0 : index
      %c0_71 = arith.constant 0 : index
      %135 = vector.load %arg19[%c0_69, %c0_70, %c0_71] : memref<1x16x128xf32, #tpu.memory_space<vmem>>, vector<1x16x128xf32>
      %136 = vector.shape_cast %135 : vector<1x16x128xf32> to vector<16x128xf32>
      %137 = vector.shape_cast %134 : vector<16x128xf32> to vector<1x16x128xf32>
      tpu.vector_store %arg19[%c0_69, %c0_70, %c0_71], %137 {strides = array<i32>} : memref<1x16x128xf32, #tpu.memory_space<vmem>>, vector<1x16x128xf32>,
    } else {
    }
    return
  }
  func.func @transform_0(%arg0: i32, %arg1: i32) -> (i32, i32, i32) {
    %c0_i32 = arith.constant 0 : i32
    %c0_i32_0 = arith.constant 0 : i32
    %c0_i32_1 = arith.constant 0 : i32
    return %arg0, %c0_i32, %c0_i32_0 : i32, i32, i32
  }
  func.func @transform_1(%arg0: i32, %arg1: i32) -> (i32, i32, i32) {
    %c0_i32 = arith.constant 0 : i32
    %c0_i32_0 = arith.constant 0 : i32
    %c0_i32_1 = arith.constant 0 : i32
    return %arg1, %c0_i32, %c0_i32_0 : i32, i32, i32
  }
  func.func @transform_2(%arg0: i32, %arg1: i32) -> (i32, i32, i32) {
    %c0_i32 = arith.constant 0 : i32
    %c0_i32_0 = arith.constant 0 : i32
    %c0_i32_1 = arith.constant 0 : i32
    return %arg1, %c0_i32, %c0_i32_0 : i32, i32, i32
  }
  func.func @transform_3(%arg0: i32, %arg1: i32) -> (i32, i32, i32) {
    %c0_i32 = arith.constant 0 : i32
    %c0_i32_0 = arith.constant 0 : i32
    %c0_i32_1 = arith.constant 0 : i32
    return %arg1, %c0_i32, %c0_i32_0 : i32, i32, i32
  }
  func.func @transform_4(%arg0: i32, %arg1: i32) -> (i32, i32, i32) {
    %c0_i32 = arith.constant 0 : i32
    %c0_i32_0 = arith.constant 0 : i32
    %c0_i32_1 = arith.constant 0 : i32
    return %arg1, %c0_i32, %c0_i32_0 : i32, i32, i32
  }
  func.func @transform_5(%arg0: i32, %arg1: i32) -> (i32, i32, i32) {
    %c0_i32 = arith.constant 0 : i32
    %c0_i32_0 = arith.constant 0 : i32
    %c0_i32_1 = arith.constant 0 : i32
    return %arg1, %c0_i32, %c0_i32_0 : i32, i32, i32
  }
  func.func @transform_6(%arg0: i32, %arg1: i32) -> (i32, i32, i32) {
    %c0_i32 = arith.constant 0 : i32
    %c0_i32_0 = arith.constant 0 : i32
    %c0_i32_1 = arith.constant 0 : i32
    return %arg1, %c0_i32, %c0_i32_0 : i32, i32, i32
  }
  func.func @transform_7(%arg0: i32, %arg1: i32) -> (i32, i32, i32) {
    %c0_i32 = arith.constant 0 : i32
    %c0_i32_0 = arith.constant 0 : i32
    %c0_i32_1 = arith.constant 0 : i32
    return %arg1, %c0_i32, %c0_i32_0 : i32, i32, i32
  }
  func.func @transform_8(%arg0: i32, %arg1: i32) -> (i32, i32) {
    %c0_i32 = arith.constant 0 : i32
    %c0_i32_0 = arith.constant 0 : i32
    %c0_i32_1 = arith.constant 0 : i32
    return %c0_i32, %c0_i32_0 : i32, i32
  }
  func.func @transform_9(%arg0: i32, %arg1: i32) -> (i32, i32) {
    %c0_i32 = arith.constant 0 : i32
    %c0_i32_0 = arith.constant 0 : i32
    %c0_i32_1 = arith.constant 0 : i32
    return %c0_i32, %c0_i32_0 : i32, i32
  }
  func.func @transform_10(%arg0: i32, %arg1: i32) -> (i32, i32) {
    %c0_i32 = arith.constant 0 : i32
    %c0_i32_0 = arith.constant 0 : i32
    %c0_i32_1 = arith.constant 0 : i32
    return %c0_i32, %c0_i32_0 : i32, i32
  }
  func.func @transform_11(%arg0: i32, %arg1: i32) -> (i32, i32) {
    %c0_i32 = arith.constant 0 : i32
    %c0_i32_0 = arith.constant 0 : i32
    %c0_i32_1 = arith.constant 0 : i32
    return %c0_i32, %c0_i32_0 : i32, i32
  }
  func.func @transform_12(%arg0: i32, %arg1: i32) -> (i32, i32) {
    %c0_i32 = arith.constant 0 : i32
    %c0_i32_0 = arith.constant 0 : i32
    %c0_i32_1 = arith.constant 0 : i32
    return %c0_i32, %c0_i32_0 : i32, i32
  }
  func.func @transform_13(%arg0: i32, %arg1: i32) -> (i32, i32) {
    %c0_i32 = arith.constant 0 : i32
    %c0_i32_0 = arith.constant 0 : i32
    %c0_i32_1 = arith.constant 0 : i32
    return %c0_i32, %c0_i32_0 : i32, i32
  }
  func.func @transform_14(%arg0: i32, %arg1: i32) -> (i32, i32) {
    %c0_i32 = arith.constant 0 : i32
    %c0_i32_0 = arith.constant 0 : i32
    %c0_i32_1 = arith.constant 0 : i32
    return %c0_i32, %c0_i32_0 : i32, i32
  }
  func.func @transform_15(%arg0: i32, %arg1: i32) -> (i32, i32) {
    %c0_i32 = arith.constant 0 : i32
    %c0_i32_0 = arith.constant 0 : i32
    %c0_i32_1 = arith.constant 0 : i32
    return %c0_i32, %c0_i32_0 : i32, i32
  }
  func.func @transform_16(%arg0: i32, %arg1: i32) -> (i32, i32) {
    %c0_i32 = arith.constant 0 : i32
    %c0_i32_0 = arith.constant 0 : i32
    %c0_i32_1 = arith.constant 0 : i32
    return %c0_i32, %c0_i32_0 : i32, i32
  }
  func.func @transform_17(%arg0: i32, %arg1: i32) -> (i32, i32, i32) {
    %c0_i32 = arith.constant 0 : i32
    %c0_i32_0 = arith.constant 0 : i32
    %c0_i32_1 = arith.constant 0 : i32
    return %arg0, %c0_i32, %c0_i32_0 : i32, i32, i32
  }
}

</mosaic_0001>

<llo_original>
// kernel: tpu_custom_call.1
$region0: #{tpu_custom_call.1}
  #allocation0 [shape = 'u32[]', space=smem, size = 0x4, offset = 0x4, fixed_abs, tag = 'smem constant byte address 0x4 - core index']
  #allocation1 [shape = 'u32[144,128]{1,0:T(1,128)}', space=vmem, size = 0x12000, scoped, tag = 'internal scratch']
  #allocation2 [shape = 'f32[16,128]{1,0:T(8,128)}', space=vmem, size = 0x2000, scoped, tag = 'scratch operand']
  %s0 = inlined_call_operand.vmem [shape: f32[2,16,128], index: 0, kind: input, shape index: {}]
  %s1 = inlined_call_operand.vmem [shape: bf16[4,128,32], index: 1, kind: input, shape index: {}]
  %s2 = inlined_call_operand.vmem [shape: f32[4,1,32], index: 2, kind: input, shape index: {}]
  %s3 = inlined_call_operand.vmem [shape: bf16[4,128,32], index: 3, kind: input, shape index: {}]
  %s4 = inlined_call_operand.vmem [shape: f32[4,1,32], index: 4, kind: input, shape index: {}]
  %s5 = inlined_call_operand.vmem [shape: bf16[4,128,32], index: 5, kind: input, shape index: {}]
  %s6 = inlined_call_operand.vmem [shape: f32[4,1,32], index: 6, kind: input, shape index: {}]
  %s7 = inlined_call_operand.vmem [shape: bf16[4,32,128], index: 7, kind: input, shape index: {}]
  %s8 = inlined_call_operand.vmem [shape: f32[1,128], index: 8, kind: input, shape index: {}]
  %s9 = inlined_call_operand.vmem [shape: bf16[128,256], index: 9, kind: input, shape index: {}]
  %s10 = inlined_call_operand.vmem [shape: f32[1,256], index: 10, kind: input, shape index: {}]
  %s11 = inlined_call_operand.vmem [shape: bf16[256,128], index: 11, kind: input, shape index: {}]
  %s12 = inlined_call_operand.vmem [shape: f32[1,128], index: 12, kind: input, shape index: {}]
  %s13 = inlined_call_operand.vmem [shape: f32[1,128], index: 13, kind: input, shape index: {}]
  %s14 = inlined_call_operand.vmem [shape: f32[1,128], index: 14, kind: input, shape index: {}]
  %s15 = inlined_call_operand.vmem [shape: f32[1,128], index: 15, kind: input, shape index: {}]
  %s16 = inlined_call_operand.vmem [shape: f32[1,128], index: 16, kind: input, shape index: {}]
  %s17 = inlined_call_operand.hbm [shape: f32[2,16,128], index: 17, kind: output, shape index: {}]
  %s18 = sld [smem:[#allocation0]]
  $region109: #{tpu_custom_call.1} parent=0
    _
  %s20 = ssub.s32 1, %s18
  %s21 = scalar_select 0, %s20, %s18
  $region1: #{tpu_custom_call.1} parent=0
    #allocation3 [shape = 'u8[16384]{0}', space=vmem, size = 0x4000, scoped, tag = 'output window, operand 0']
    #allocation4 [shape = 's32[2]{0}', space=sflag, size = 0x8, scoped, tag = 'scoped memory for tpu_custom_call.1']
    %22 = vsyncpa [#allocation4], 0
    %s23 = scalar_lea.sflag [#allocation4], 1
    %24 = vsyncpa %s23, 0
    loop: start=0, step=1, limit=10
    $region2: #{tpu_custom_call.1} parent=1 // loop_pre_header
      _
    $region3: #{tpu_custom_call.1} parent=1 // loop_header
      %s26 = sphi 0, %s30
      %p27 = scmp.ge.s32.totalorder %s26, 10
      %s33 = sphi 0, %s45
      %s34 = sphi 0, %s41
      %s35 = sphi 0, %s33
      %s36 = sphi 0, %s34
      %s37 = sphi 0, %s35
      %s38 = sphi 0, %s36
      %s48 = sphi 0, %s50
      %s51 = sphi 0, %s48
      %s52 = sphi 0, %s51
      %s68 = sphi 0, %s52
      %s74 = sphi 0, %s76
      %s77 = sphi 0, %s74
      %s78 = sphi 0, %s77
      %s94 = sphi 0, %s78
      %s100 = sphi 0, %s102
      %s103 = sphi 0, %s100
      %s104 = sphi 0, %s103
      %s120 = sphi 0, %s104
      %s126 = sphi 0, %s128
      %s129 = sphi 0, %s126
      %s130 = sphi 0, %s129
      %s146 = sphi 0, %s130
      %s152 = sphi 0, %s154
      %s155 = sphi 0, %s152
      %s156 = sphi 0, %s155
      %s172 = sphi 0, %s156
      %s178 = sphi 0, %s180
      %s181 = sphi 0, %s178
      %s182 = sphi 0, %s181
      %s198 = sphi 0, %s182
      %s204 = sphi 0, %s206
      %s207 = sphi 0, %s204
      %s208 = sphi 0, %s207
      %s224 = sphi 0, %s208
      %s230 = sphi 0, %s232
      %s233 = sphi 0, %s230
      %s234 = sphi 0, %s233
      %s250 = sphi 0, %s234
      %s254 = sphi 0, %s254
      %s256 = sphi 0, %s254
      %s257 = sphi 0, %s256
      %s271 = sphi 0, %s257
      %s275 = sphi 0, %s275
      %s277 = sphi 0, %s275
      %s278 = sphi 0, %s277
      %s292 = sphi 0, %s278
      %s296 = sphi 0, %s296
      %s298 = sphi 0, %s296
      %s299 = sphi 0, %s298
      %s313 = sphi 0, %s299
      %s317 = sphi 0, %s317
      %s319 = sphi 0, %s317
      %s320 = sphi 0, %s319
      %s334 = sphi 0, %s320
      %s338 = sphi 0, %s338
      %s340 = sphi 0, %s338
      %s341 = sphi 0, %s340
      %s355 = sphi 0, %s341
      %s359 = sphi 0, %s359
      %s361 = sphi 0, %s359
      %s362 = sphi 0, %s361
      %s376 = sphi 0, %s362
      %s380 = sphi 0, %s380
      %s382 = sphi 0, %s380
      %s383 = sphi 0, %s382
      %s397 = sphi 0, %s383
      %s401 = sphi 0, %s401
      %s403 = sphi 0, %s401
      %s404 = sphi 0, %s403
      %s418 = sphi 0, %s404
      %s422 = sphi 0, %s422
      %s424 = sphi 0, %s422
      %s425 = sphi 0, %s424
      %s439 = sphi 0, %s425
      %s445 = sphi 0, %s447
      %s448 = sphi 0, %s445
      %s449 = sphi 0, %s448
      %s465 = sphi 0, %s449
    $region4: #{tpu_custom_call.1} parent=1 // loop_header_branch
      %29 = sbr.rel (%p27) target = $region8
    $region5: #{tpu_custom_call.1} parent=1 // loop_body
      %s31 = ssub.s32 %s26, 1
      %s32 = ssub.s32 %s26, 2
      %s39 = sadd.s32 1, %s34
      %p40 = scmp.ge.s32.totalorder %s39, 4
      %s41 = scalar_select %p40, 0, %s39
      %s42 = sadd.s32 1, %s33
      %s43 = scalar_select %p40, %s42, %s33
      %p44 = scmp.ge.s32.totalorder %s43, 2
      %s45 = scalar_select %p44, 0, %s43
      %s46 = ssub.s32 %s33, %s45
      %p47 = scmp.eq.s32.totalorder %s46, 0
      %s49 = sadd.s32 %s48, 1
      %s50 = scalar_select %p47, %s48, %s49
      %p53 = pneg %p47
      %p54 = scmp.eq.s32.totalorder %s26, 7
      %p55 = por %p53, %p54
      %p56 = scmp.ne.s32.totalorder %s48, %s51
      %p57 = scmp.eq.s32.totalorder %s26, 0
      %p58 = por %p56, %p57
      %p59 = scmp.ne.s32.totalorder %s48, %s51
      %p60 = scmp.eq.s32.totalorder %s31, 7
      %p61 = por %p59, %p60
      %p62 = scmp.ne.s32.totalorder %s51, %s52
      %p63 = scmp.eq.s32.totalorder %s31, 0
      %p64 = por %p62, %p63
      %p65 = scmp.ne.s32.totalorder %s51, %s52
      %p66 = scmp.eq.s32.totalorder %s32, 7
      %p67 = por %p65, %p66
      %p69 = scmp.ne.s32.totalorder %s52, %s68
      %p70 = scmp.eq.s32.totalorder %s32, 0
      %p71 = por %p69, %p70
      %s72 = ssub.s32 %s34, %s41
      %p73 = scmp.eq.s32.totalorder %s72, 0
      %s75 = sadd.s32 %s74, 1
      %s76 = scalar_select %p73, %s74, %s75
      %p79 = pneg %p73
      %p80 = scmp.eq.s32.totalorder %s26, 7
      %p81 = por %p79, %p80
      %p82 = scmp.ne.s32.totalorder %s74, %s77
      %p83 = scmp.eq.s32.totalorder %s26, 0
      %p84 = por %p82, %p83
      %p85 = scmp.ne.s32.totalorder %s74, %s77
      %p86 = scmp.eq.s32.totalorder %s31, 7
      %p87 = por %p85, %p86
      %p88 = scmp.ne.s32.totalorder %s77, %s78
      %p89 = scmp.eq.s32.totalorder %s31, 0
      %p90 = por %p88, %p89
      %p91 = scmp.ne.s32.totalorder %s77, %s78
      %p92 = scmp.eq.s32.totalorder %s32, 7
      %p93 = por %p91, %p92
      %p95 = scmp.ne.s32.totalorder %s78, %s94
      %p96 = scmp.eq.s32.totalorder %s32, 0
      %p97 = por %p95, %p96
      %s98 = ssub.s32 %s34, %s41
      %p99 = scmp.eq.s32.totalorder %s98, 0
      %s101 = sadd.s32 %s100, 1
      %s102 = scalar_select %p99, %s100, %s101
      %p105 = pneg %p99
      %p106 = scmp.eq.s32.totalorder %s26, 7
      %p107 = por %p105, %p106
      %p108 = scmp.ne.s32.totalorder %s100, %s103
      %p109 = scmp.eq.s32.totalorder %s26, 0
      %p110 = por %p108, %p109
      %p111 = scmp.ne.s32.totalorder %s100, %s103
      %p112 = scmp.eq.s32.totalorder %s31, 7
      %p113 = por %p111, %p112
      %p114 = scmp.ne.s32.totalorder %s103, %s104
      %p115 = scmp.eq.s32.totalorder %s31, 0
      %p116 = por %p114, %p115
      %p117 = scmp.ne.s32.totalorder %s103, %s104
      %p118 = scmp.eq.s32.totalorder %s32, 7
      %p119 = por %p117, %p118
      %p121 = scmp.ne.s32.totalorder %s104, %s120
      %p122 = scmp.eq.s32.totalorder %s32, 0
      %p123 = por %p121, %p122
      %s124 = ssub.s32 %s34, %s41
      %p125 = scmp.eq.s32.totalorder %s124, 0
      %s127 = sadd.s32 %s126, 1
      %s128 = scalar_select %p125, %s126, %s127
      %p131 = pneg %p125
      %p132 = scmp.eq.s32.totalorder %s26, 7
      %p133 = por %p131, %p132
      %p134 = scmp.ne.s32.totalorder %s126, %s129
      %p135 = scmp.eq.s32.totalorder %s26, 0
      %p136 = por %p134, %p135
      %p137 = scmp.ne.s32.totalorder %s126, %s129
      %p138 = scmp.eq.s32.totalorder %s31, 7
      %p139 = por %p137, %p138
      %p140 = scmp.ne.s32.totalorder %s129, %s130
      %p141 = scmp.eq.s32.totalorder %s31, 0
      %p142 = por %p140, %p141
      %p143 = scmp.ne.s32.totalorder %s129, %s130
      %p144 = scmp.eq.s32.totalorder %s32, 7
      %p145 = por %p143, %p144
      %p147 = scmp.ne.s32.totalorder %s130, %s146
      %p148 = scmp.eq.s32.totalorder %s32, 0
      %p149 = por %p147, %p148
      %s150 = ssub.s32 %s34, %s41
      %p151 = scmp.eq.s32.totalorder %s150, 0
      %s153 = sadd.s32 %s152, 1
      %s154 = scalar_select %p151, %s152, %s153
      %p157 = pneg %p151
      %p158 = scmp.eq.s32.totalorder %s26, 7
      %p159 = por %p157, %p158
      %p160 = scmp.ne.s32.totalorder %s152, %s155
      %p161 = scmp.eq.s32.totalorder %s26, 0
      %p162 = por %p160, %p161
      %p163 = scmp.ne.s32.totalorder %s152, %s155
      %p164 = scmp.eq.s32.totalorder %s31, 7
      %p165 = por %p163, %p164
      %p166 = scmp.ne.s32.totalorder %s155, %s156
      %p167 = scmp.eq.s32.totalorder %s31, 0
      %p168 = por %p166, %p167
      %p169 = scmp.ne.s32.totalorder %s155, %s156
      %p170 = scmp.eq.s32.totalorder %s32, 7
      %p171 = por %p169, %p170
      %p173 = scmp.ne.s32.totalorder %s156, %s172
      %p174 = scmp.eq.s32.totalorder %s32, 0
      %p175 = por %p173, %p174
      %s176 = ssub.s32 %s34, %s41
      %p177 = scmp.eq.s32.totalorder %s176, 0
      %s179 = sadd.s32 %s178, 1
      %s180 = scalar_select %p177, %s178, %s179
      %p183 = pneg %p177
      %p184 = scmp.eq.s32.totalorder %s26, 7
      %p185 = por %p183, %p184
      %p186 = scmp.ne.s32.totalorder %s178, %s181
      %p187 = scmp.eq.s32.totalorder %s26, 0
      %p188 = por %p186, %p187
      %p189 = scmp.ne.s32.totalorder %s178, %s181
      %p190 = scmp.eq.s32.totalorder %s31, 7
      %p191 = por %p189, %p190
      %p192 = scmp.ne.s32.totalorder %s181, %s182
      %p193 = scmp.eq.s32.totalorder %s31, 0
      %p194 = por %p192, %p193
      %p195 = scmp.ne.s32.totalorder %s181, %s182
      %p196 = scmp.eq.s32.totalorder %s32, 7
      %p197 = por %p195, %p196
      %p199 = scmp.ne.s32.totalorder %s182, %s198
      %p200 = scmp.eq.s32.totalorder %s32, 0
      %p201 = por %p199, %p200
      %s202 = ssub.s32 %s34, %s41
      %p203 = scmp.eq.s32.totalorder %s202, 0
      %s205 = sadd.s32 %s204, 1
      %s206 = scalar_select %p203, %s204, %s205
      %p209 = pneg %p203
      %p210 = scmp.eq.s32.totalorder %s26, 7
      %p211 = por %p209, %p210
      %p212 = scmp.ne.s32.totalorder %s204, %s207
      %p213 = scmp.eq.s32.totalorder %s26, 0
      %p214 = por %p212, %p213
      %p215 = scmp.ne.s32.totalorder %s204, %s207
      %p216 = scmp.eq.s32.totalorder %s31, 7
      %p217 = por %p215, %p216
      %p218 = scmp.ne.s32.totalorder %s207, %s208
      %p219 = scmp.eq.s32.totalorder %s31, 0
      %p220 = por %p218, %p219
      %p221 = scmp.ne.s32.totalorder %s207, %s208
      %p222 = scmp.eq.s32.totalorder %s32, 7
      %p223 = por %p221, %p222
      %p225 = scmp.ne.s32.totalorder %s208, %s224
      %p226 = scmp.eq.s32.totalorder %s32, 0
      %p227 = por %p225, %p226
      %s228 = ssub.s32 %s34, %s41
      %p229 = scmp.eq.s32.totalorder %s228, 0
      %s231 = sadd.s32 %s230, 1
      %s232 = scalar_select %p229, %s230, %s231
      %p235 = pneg %p229
      %p236 = scmp.eq.s32.totalorder %s26, 7
      %p237 = por %p235, %p236
      %p238 = scmp.ne.s32.totalorder %s230, %s233
      %p239 = scmp.eq.s32.totalorder %s26, 0
      %p240 = por %p238, %p239
      %p241 = scmp.ne.s32.totalorder %s230, %s233
      %p242 = scmp.eq.s32.totalorder %s31, 7
      %p243 = por %p241, %p242
      %p244 = scmp.ne.s32.totalorder %s233, %s234
      %p245 = scmp.eq.s32.totalorder %s31, 0
      %p246 = por %p244, %p245
      %p247 = scmp.ne.s32.totalorder %s233, %s234
      %p248 = scmp.eq.s32.totalorder %s32, 7
      %p249 = por %p247, %p248
      %p251 = scmp.ne.s32.totalorder %s234, %s250
      %p252 = scmp.eq.s32.totalorder %s32, 0
      %p253 = por %p251, %p252
      %s255 = sadd.s32 %s254, 1
      %p258 = scmp.eq.s32.totalorder %s26, 7
      %p259 = scmp.ne.s32.totalorder %s254, %s256
      %p260 = scmp.eq.s32.totalorder %s26, 0
      %p261 = por %p259, %p260
      %p262 = scmp.ne.s32.totalorder %s254, %s256
      %p263 = scmp.eq.s32.totalorder %s31, 7
      %p264 = por %p262, %p263
      %p265 = scmp.ne.s32.totalorder %s256, %s257
      %p266 = scmp.eq.s32.totalorder %s31, 0
      %p267 = por %p265, %p266
      %p268 = scmp.ne.s32.totalorder %s256, %s257
      %p269 = scmp.eq.s32.totalorder %s32, 7
      %p270 = por %p268, %p269
      %p272 = scmp.ne.s32.totalorder %s257, %s271
      %p273 = scmp.eq.s32.totalorder %s32, 0
      %p274 = por %p272, %p273
      %s276 = sadd.s32 %s275, 1
      %p279 = scmp.eq.s32.totalorder %s26, 7
      %p280 = scmp.ne.s32.totalorder %s275, %s277
      %p281 = scmp.eq.s32.totalorder %s26, 0
      %p282 = por %p280, %p281
      %p283 = scmp.ne.s32.totalorder %s275, %s277
      %p284 = scmp.eq.s32.totalorder %s31, 7
      %p285 = por %p283, %p284
      %p286 = scmp.ne.s32.totalorder %s277, %s278
      %p287 = scmp.eq.s32.totalorder %s31, 0
      %p288 = por %p286, %p287
      %p289 = scmp.ne.s32.totalorder %s277, %s278
      %p290 = scmp.eq.s32.totalorder %s32, 7
      %p291 = por %p289, %p290
      %p293 = scmp.ne.s32.totalorder %s278, %s292
      %p294 = scmp.eq.s32.totalorder %s32, 0
      %p295 = por %p293, %p294
      %s297 = sadd.s32 %s296, 1
      %p300 = scmp.eq.s32.totalorder %s26, 7
      %p301 = scmp.ne.s32.totalorder %s296, %s298
      %p302 = scmp.eq.s32.totalorder %s26, 0
      %p303 = por %p301, %p302
      %p304 = scmp.ne.s32.totalorder %s296, %s298
      %p305 = scmp.eq.s32.totalorder %s31, 7
      %p306 = por %p304, %p305
      %p307 = scmp.ne.s32.totalorder %s298, %s299
      %p308 = scmp.eq.s32.totalorder %s31, 0
      %p309 = por %p307, %p308
      %p310 = scmp.ne.s32.totalorder %s298, %s299
      %p311 = scmp.eq.s32.totalorder %s32, 7
      %p312 = por %p310, %p311
      %p314 = scmp.ne.s32.totalorder %s299, %s313
      %p315 = scmp.eq.s32.totalorder %s32, 0
      %p316 = por %p314, %p315
      %s318 = sadd.s32 %s317, 1
      %p321 = scmp.eq.s32.totalorder %s26, 7
      %p322 = scmp.ne.s32.totalorder %s317, %s319
      %p323 = scmp.eq.s32.totalorder %s26, 0
      %p324 = por %p322, %p323
      %p325 = scmp.ne.s32.totalorder %s317, %s319
      %p326 = scmp.eq.s32.totalorder %s31, 7
      %p327 = por %p325, %p326
      %p328 = scmp.ne.s32.totalorder %s319, %s320
      %p329 = scmp.eq.s32.totalorder %s31, 0
      %p330 = por %p328, %p329
      %p331 = scmp.ne.s32.totalorder %s319, %s320
      %p332 = scmp.eq.s32.totalorder %s32, 7
      %p333 = por %p331, %p332
      %p335 = scmp.ne.s32.totalorder %s320, %s334
      %p336 = scmp.eq.s32.totalorder %s32, 0
      %p337 = por %p335, %p336
      %s339 = sadd.s32 %s338, 1
      %p342 = scmp.eq.s32.totalorder %s26, 7
      %p343 = scmp.ne.s32.totalorder %s338, %s340
      %p344 = scmp.eq.s32.totalorder %s26, 0
      %p345 = por %p343, %p344
      %p346 = scmp.ne.s32.totalorder %s338, %s340
      %p347 = scmp.eq.s32.totalorder %s31, 7
      %p348 = por %p346, %p347
      %p349 = scmp.ne.s32.totalorder %s340, %s341
      %p350 = scmp.eq.s32.totalorder %s31, 0
      %p351 = por %p349, %p350
      %p352 = scmp.ne.s32.totalorder %s340, %s341
      %p353 = scmp.eq.s32.totalorder %s32, 7
      %p354 = por %p352, %p353
      %p356 = scmp.ne.s32.totalorder %s341, %s355
      %p357 = scmp.eq.s32.totalorder %s32, 0
      %p358 = por %p356, %p357
      %s360 = sadd.s32 %s359, 1
      %p363 = scmp.eq.s32.totalorder %s26, 7
      %p364 = scmp.ne.s32.totalorder %s359, %s361
      %p365 = scmp.eq.s32.totalorder %s26, 0
      %p366 = por %p364, %p365
      %p367 = scmp.ne.s32.totalorder %s359, %s361
      %p368 = scmp.eq.s32.totalorder %s31, 7
      %p369 = por %p367, %p368
      %p370 = scmp.ne.s32.totalorder %s361, %s362
      %p371 = scmp.eq.s32.totalorder %s31, 0
      %p372 = por %p370, %p371
      %p373 = scmp.ne.s32.totalorder %s361, %s362
      %p374 = scmp.eq.s32.totalorder %s32, 7
      %p375 = por %p373, %p374
      %p377 = scmp.ne.s32.totalorder %s362, %s376
      %p378 = scmp.eq.s32.totalorder %s32, 0
      %p379 = por %p377, %p378
      %s381 = sadd.s32 %s380, 1
      %p384 = scmp.eq.s32.totalorder %s26, 7
      %p385 = scmp.ne.s32.totalorder %s380, %s382
      %p386 = scmp.eq.s32.totalorder %s26, 0
      %p387 = por %p385, %p386
      %p388 = scmp.ne.s32.totalorder %s380, %s382
      %p389 = scmp.eq.s32.totalorder %s31, 7
      %p390 = por %p388, %p389
      %p391 = scmp.ne.s32.totalorder %s382, %s383
      %p392 = scmp.eq.s32.totalorder %s31, 0
      %p393 = por %p391, %p392
      %p394 = scmp.ne.s32.totalorder %s382, %s383
      %p395 = scmp.eq.s32.totalorder %s32, 7
      %p396 = por %p394, %p395
      %p398 = scmp.ne.s32.totalorder %s383, %s397
      %p399 = scmp.eq.s32.totalorder %s32, 0
      %p400 = por %p398, %p399
      %s402 = sadd.s32 %s401, 1
      %p405 = scmp.eq.s32.totalorder %s26, 7
      %p406 = scmp.ne.s32.totalorder %s401, %s403
      %p407 = scmp.eq.s32.totalorder %s26, 0
      %p408 = por %p406, %p407
      %p409 = scmp.ne.s32.totalorder %s401, %s403
      %p410 = scmp.eq.s32.totalorder %s31, 7
      %p411 = por %p409, %p410
      %p412 = scmp.ne.s32.totalorder %s403, %s404
      %p413 = scmp.eq.s32.totalorder %s31, 0
      %p414 = por %p412, %p413
      %p415 = scmp.ne.s32.totalorder %s403, %s404
      %p416 = scmp.eq.s32.totalorder %s32, 7
      %p417 = por %p415, %p416
      %p419 = scmp.ne.s32.totalorder %s404, %s418
      %p420 = scmp.eq.s32.totalorder %s32, 0
      %p421 = por %p419, %p420
      %s423 = sadd.s32 %s422, 1
      %p426 = scmp.eq.s32.totalorder %s26, 7
      %p427 = scmp.ne.s32.totalorder %s422, %s424
      %p428 = scmp.eq.s32.totalorder %s26, 0
      %p429 = por %p427, %p428
      %p430 = scmp.ne.s32.totalorder %s422, %s424
      %p431 = scmp.eq.s32.totalorder %s31, 7
      %p432 = por %p430, %p431
      %p433 = scmp.ne.s32.totalorder %s424, %s425
      %p434 = scmp.eq.s32.totalorder %s31, 0
      %p435 = por %p433, %p434
      %p436 = scmp.ne.s32.totalorder %s424, %s425
      %p437 = scmp.eq.s32.totalorder %s32, 7
      %p438 = por %p436, %p437
      %p440 = scmp.ne.s32.totalorder %s425, %s439
      %p441 = scmp.eq.s32.totalorder %s32, 0
      %p442 = por %p440, %p441
      %s443 = ssub.s32 %s33, %s45
      %p444 = scmp.eq.s32.totalorder %s443, 0
      %s446 = sadd.s32 %s445, 1
      %s447 = scalar_select %p444, %s445, %s446
      %p450 = pneg %p444
      %p451 = scmp.eq.s32.totalorder %s26, 7
      %p452 = por %p450, %p451
      %p453 = scmp.ne.s32.totalorder %s445, %s448
      %p454 = scmp.eq.s32.totalorder %s26, 0
      %p455 = por %p453, %p454
      %p456 = scmp.ne.s32.totalorder %s445, %s448
      %p457 = scmp.eq.s32.totalorder %s31, 7
      %p458 = por %p456, %p457
      %p459 = scmp.ne.s32.totalorder %s448, %s449
      %p460 = scmp.eq.s32.totalorder %s31, 0
      %p461 = por %p459, %p460
      %p462 = scmp.ne.s32.totalorder %s448, %s449
      %p463 = scmp.eq.s32.totalorder %s32, 7
      %p464 = por %p462, %p463
      %p466 = scmp.ne.s32.totalorder %s449, %s465
      %p467 = scmp.eq.s32.totalorder %s32, 0
      %p468 = por %p466, %p467
      %p469 = scmp.le.s32.totalorder 1, %s26
      %p470 = scmp.lt.s32.totalorder %s26, 9
      %p471 = pnand %p469, %p470
      %p472 = pneg %p471
      // Predicated region
      $region9: #{tpu_custom_call.1} parent=5 // pred_check
        _
      $region10: #{tpu_custom_call.1} parent=5 // pred_check_branch
        %474 = sbr.rel (%p471) target = $region12
      $region11: #{tpu_custom_call.1} parent=5 // pred_region
        %s475 = ssub.s32 %s26, 1
        // Predicated region
        $region13: #{tpu_custom_call.1} parent=11 // pred_check
          %p476 = pneg %p267
        $region14: #{tpu_custom_call.1} parent=11 // pred_check_branch
          %478 = sbr.rel (%p476) target = $region16
        $region15: #{tpu_custom_call.1} parent=11 // pred_region
          _
        $region16: #{tpu_custom_call.1} parent=11 // pred_fallthru
          _
        // Predicated region
        $region17: #{tpu_custom_call.1} parent=11 // pred_check
          %p479 = pneg %p288
        $region18: #{tpu_custom_call.1} parent=11 // pred_check_branch
          %481 = sbr.rel (%p479) target = $region20
        $region19: #{tpu_custom_call.1} parent=11 // pred_region
          _
        $region20: #{tpu_custom_call.1} parent=11 // pred_fallthru
          _
        // Predicated region
        $region21: #{tpu_custom_call.1} parent=11 // pred_check
          %p482 = pneg %p309
        $region22: #{tpu_custom_call.1} parent=11 // pred_check_branch
          %484 = sbr.rel (%p482) target = $region24
        $region23: #{tpu_custom_call.1} parent=11 // pred_region
          _
        $region24: #{tpu_custom_call.1} parent=11 // pred_fallthru
          _
        // Predicated region
        $region25: #{tpu_custom_call.1} parent=11 // pred_check
          %p485 = pneg %p330
        $region26: #{tpu_custom_call.1} parent=11 // pred_check_branch
          %487 = sbr.rel (%p485) target = $region28
        $region27: #{tpu_custom_call.1} parent=11 // pred_region
          _
        $region28: #{tpu_custom_call.1} parent=11 // pred_fallthru
          _
        // Predicated region
        $region29: #{tpu_custom_call.1} parent=11 // pred_check
          %p488 = pneg %p351
        $region30: #{tpu_custom_call.1} parent=11 // pred_check_branch
          %490 = sbr.rel (%p488) target = $region32
        $region31: #{tpu_custom_call.1} parent=11 // pred_region
          _
        $region32: #{tpu_custom_call.1} parent=11 // pred_fallthru
          _
        // Predicated region
        $region33: #{tpu_custom_call.1} parent=11 // pred_check
          %p491 = pneg %p372
        $region34: #{tpu_custom_call.1} parent=11 // pred_check_branch
          %493 = sbr.rel (%p491) target = $region36
        $region35: #{tpu_custom_call.1} parent=11 // pred_region
          _
        $region36: #{tpu_custom_call.1} parent=11 // pred_fallthru
          _
        // Predicated region
        $region37: #{tpu_custom_call.1} parent=11 // pred_check
          %p494 = pneg %p393
        $region38: #{tpu_custom_call.1} parent=11 // pred_check_branch
          %496 = sbr.rel (%p494) target = $region40
        $region39: #{tpu_custom_call.1} parent=11 // pred_region
          _
        $region40: #{tpu_custom_call.1} parent=11 // pred_fallthru
          _
        // Predicated region
        $region41: #{tpu_custom_call.1} parent=11 // pred_check
          %p497 = pneg %p414
        $region42: #{tpu_custom_call.1} parent=11 // pred_check_branch
          %499 = sbr.rel (%p497) target = $region44
        $region43: #{tpu_custom_call.1} parent=11 // pred_region
          _
        $region44: #{tpu_custom_call.1} parent=11 // pred_fallthru
          _
        // Predicated region
        $region45: #{tpu_custom_call.1} parent=11 // pred_check
          %p500 = pneg %p435
        $region46: #{tpu_custom_call.1} parent=11 // pred_check_branch
          %502 = sbr.rel (%p500) target = $region48
        $region47: #{tpu_custom_call.1} parent=11 // pred_region
          _
        $region48: #{tpu_custom_call.1} parent=11 // pred_fallthru
          _
      $region12: #{tpu_custom_call.1} parent=5 // pred_fallthru
        _
      %p503 = scmp.lt.s32.totalorder %s26, 8
      // Predicated region
      $region49: #{tpu_custom_call.1} parent=5 // pred_check
        %p504 = pneg %p503
      $region50: #{tpu_custom_call.1} parent=5 // pred_check_branch
        %506 = sbr.rel (%p504) target = $region52
      $region51: #{tpu_custom_call.1} parent=5 // pred_region
        // Predicated region
        $region53: #{tpu_custom_call.1} parent=51 // pred_check
          %p507 = pneg %p58
        $region54: #{tpu_custom_call.1} parent=51 // pred_check_branch
          %509 = sbr.rel (%p507) target = $region56
        $region55: #{tpu_custom_call.1} parent=51 // pred_region
          %p510 = scmp.lt.s32.totalorder %s33, 1
          %s511 = scalar_select %p510, %s33, 1
          %s512 = smul.addr %s511, 2
          %s513 = smul.addr %s512, 8
          %s514 = scalar_lea.vmem %s0, %s513
        $region56: #{tpu_custom_call.1} parent=51 // pred_fallthru
          _
        // Predicated region
        $region57: #{tpu_custom_call.1} parent=51 // pred_check
          %p515 = pneg %p84
        $region58: #{tpu_custom_call.1} parent=51 // pred_check_branch
          %517 = sbr.rel (%p515) target = $region60
        $region59: #{tpu_custom_call.1} parent=51 // pred_region
          %p518 = scmp.lt.s32.totalorder %s34, 3
          %s519 = scalar_select %p518, %s34, 3
          %s520 = smul.addr %s519, 16
          %s521 = smul.addr %s520, 4
          %s522 = scalar_lea.vmem %s1, %s521
        $region60: #{tpu_custom_call.1} parent=51 // pred_fallthru
          _
        // Predicated region
        $region61: #{tpu_custom_call.1} parent=51 // pred_check
          %p523 = pneg %p110
        $region62: #{tpu_custom_call.1} parent=51 // pred_check_branch
          %525 = sbr.rel (%p523) target = $region64
        $region63: #{tpu_custom_call.1} parent=51 // pred_region
          %p526 = scmp.lt.s32.totalorder %s34, 3
          %s527 = scalar_select %p526, %s34, 3
          %s528 = scalar_lea.vmem %s2, %s527
        $region64: #{tpu_custom_call.1} parent=51 // pred_fallthru
          _
        // Predicated region
        $region65: #{tpu_custom_call.1} parent=51 // pred_check
          %p529 = pneg %p136
        $region66: #{tpu_custom_call.1} parent=51 // pred_check_branch
          %531 = sbr.rel (%p529) target = $region68
        $region67: #{tpu_custom_call.1} parent=51 // pred_region
          %p532 = scmp.lt.s32.totalorder %s34, 3
          %s533 = scalar_select %p532, %s34, 3
          %s534 = smul.addr %s533, 16
          %s535 = smul.addr %s534, 4
          %s536 = scalar_lea.vmem %s3, %s535
        $region68: #{tpu_custom_call.1} parent=51 // pred_fallthru
          _
        // Predicated region
        $region69: #{tpu_custom_call.1} parent=51 // pred_check
          %p537 = pneg %p162
        $region70: #{tpu_custom_call.1} parent=51 // pred_check_branch
          %539 = sbr.rel (%p537) target = $region72
        $region71: #{tpu_custom_call.1} parent=51 // pred_region
          %p540 = scmp.lt.s32.totalorder %s34, 3
          %s541 = scalar_select %p540, %s34, 3
          %s542 = scalar_lea.vmem %s4, %s541
        $region72: #{tpu_custom_call.1} parent=51 // pred_fallthru
          _
        // Predicated region
        $region73: #{tpu_custom_call.1} parent=51 // pred_check
          %p543 = pneg %p188
        $region74: #{tpu_custom_call.1} parent=51 // pred_check_branch
          %545 = sbr.rel (%p543) target = $region76
        $region75: #{tpu_custom_call.1} parent=51 // pred_region
          %p546 = scmp.lt.s32.totalorder %s34, 3
          %s547 = scalar_select %p546, %s34, 3
          %s548 = smul.addr %s547, 16
          %s549 = smul.addr %s548, 4
          %s550 = scalar_lea.vmem %s5, %s549
        $region76: #{tpu_custom_call.1} parent=51 // pred_fallthru
          _
        // Predicated region
        $region77: #{tpu_custom_call.1} parent=51 // pred_check
          %p551 = pneg %p214
        $region78: #{tpu_custom_call.1} parent=51 // pred_check_branch
          %553 = sbr.rel (%p551) target = $region80
        $region79: #{tpu_custom_call.1} parent=51 // pred_region
          %p554 = scmp.lt.s32.totalorder %s34, 3
          %s555 = scalar_select %p554, %s34, 3
          %s556 = scalar_lea.vmem %s6, %s555
        $region80: #{tpu_custom_call.1} parent=51 // pred_fallthru
          _
        // Predicated region
        $region81: #{tpu_custom_call.1} parent=51 // pred_check
          %p557 = pneg %p240
        $region82: #{tpu_custom_call.1} parent=51 // pred_check_branch
          %559 = sbr.rel (%p557) target = $region84
        $region83: #{tpu_custom_call.1} parent=51 // pred_region
          %p560 = scmp.lt.s32.totalorder %s34, 3
          %s561 = scalar_select %p560, %s34, 3
          %s562 = smul.addr %s561, 4
          %s563 = smul.addr %s562, 4
          %s564 = scalar_lea.vmem %s7, %s563
        $region84: #{tpu_custom_call.1} parent=51 // pred_fallthru
          _
      $region52: #{tpu_custom_call.1} parent=5 // pred_fallthru
        _
      %p565 = scmp.le.s32.totalorder 1, %s26
      %p566 = scmp.lt.s32.totalorder %s26, 9
      %p567 = pnand %p565, %p566
      %p568 = pneg %p567
      // Predicated region
      $region85: #{tpu_custom_call.1} parent=5 // pred_check
        _
      $region86: #{tpu_custom_call.1} parent=5 // pred_check_branch
        %570 = sbr.rel (%p567) target = $region88
      $region87: #{tpu_custom_call.1} parent=5 // pred_region
        %s571 = ssub.s32 %s26, 1
        %p572 = scmp.lt.s32.totalorder %s35, 1
        %s573 = scalar_select %p572, %s35, 1
        %s574 = smul.addr %s573, 2
        %s575 = smul.addr %s574, 8
        %s576 = scalar_lea.vmem %s0, %s575
        %p577 = pneg %p64
        %p578 = pneg %p61
        %p579 = scmp.lt.s32.totalorder %s36, 3
        %s580 = scalar_select %p579, %s36, 3
        %s581 = smul.addr %s580, 16
        %s582 = smul.addr %s581, 4
        %s583 = scalar_lea.vmem %s1, %s582
        %p584 = pneg %p90
        %p585 = pneg %p87
        %p586 = scmp.lt.s32.totalorder %s36, 3
        %s587 = scalar_select %p586, %s36, 3
        %s588 = scalar_lea.vmem %s2, %s587
        %p589 = pneg %p116
        %p590 = pneg %p113
        %p591 = scmp.lt.s32.totalorder %s36, 3
        %s592 = scalar_select %p591, %s36, 3
        %s593 = smul.addr %s592, 16
        %s594 = smul.addr %s593, 4
        %s595 = scalar_lea.vmem %s3, %s594
        %p596 = pneg %p142
        %p597 = pneg %p139
        %p598 = scmp.lt.s32.totalorder %s36, 3
        %s599 = scalar_select %p598, %s36, 3
        %s600 = scalar_lea.vmem %s4, %s599
        %p601 = pneg %p168
        %p602 = pneg %p165
        %p603 = scmp.lt.s32.totalorder %s36, 3
        %s604 = scalar_select %p603, %s36, 3
        %s605 = smul.addr %s604, 16
        %s606 = smul.addr %s605, 4
        %s607 = scalar_lea.vmem %s5, %s606
        %p608 = pneg %p194
        %p609 = pneg %p191
        %p610 = scmp.lt.s32.totalorder %s36, 3
        %s611 = scalar_select %p610, %s36, 3
        %s612 = scalar_lea.vmem %s6, %s611
        %p613 = pneg %p220
        %p614 = pneg %p217
        %p615 = scmp.lt.s32.totalorder %s36, 3
        %s616 = scalar_select %p615, %s36, 3
        %s617 = smul.addr %s616, 4
        %s618 = smul.addr %s617, 4
        %s619 = scalar_lea.vmem %s7, %s618
        %p620 = pneg %p246
        %p621 = pneg %p243
        %p622 = pneg %p267
        %p623 = pneg %p264
        %p624 = pneg %p288
        %p625 = pneg %p285
        %p626 = pneg %p309
        %p627 = pneg %p306
        %p628 = pneg %p330
        %p629 = pneg %p327
        %p630 = pneg %p351
        %p631 = pneg %p348
        %p632 = pneg %p372
        %p633 = pneg %p369
        %p634 = pneg %p393
        %p635 = pneg %p390
        %p636 = pneg %p414
        %p637 = pneg %p411
        %p638 = pneg %p435
        %p639 = pneg %p432
        %p640 = pneg %p461
        %p641 = pneg %p458
        %s642 = sand.u32 %s448, 1
        %s643 = scalar_lea.sflag [#allocation4], %s642
        %s644 = sand.u32 %s448, 1
        %s645 = smul.addr %s644, 16
        %s646 = scalar_lea.vmem [#allocation3], %s645
        %p647 = scmp.lt.s32.totalorder %s35, 1
        %s648 = scalar_select %p647, %s35, 1
        %s649 = smul.addr %s648, 2
        %s650 = smul.addr %s649, 8
        %s651 = scalar_lea.vmem %s0, %s650
        %p652 = scmp.lt.s32.totalorder %s36, 3
        %s653 = scalar_select %p652, %s36, 3
        %s654 = smul.addr %s653, 16
        %s655 = smul.addr %s654, 4
        %s656 = scalar_lea.vmem %s1, %s655
        %p657 = scmp.lt.s32.totalorder %s36, 3
        %s658 = scalar_select %p657, %s36, 3
        %s659 = scalar_lea.vmem %s2, %s658
        %p660 = scmp.lt.s32.totalorder %s36, 3
        %s661 = scalar_select %p660, %s36, 3
        %s662 = smul.addr %s661, 16
        %s663 = smul.addr %s662, 4
        %s664 = scalar_lea.vmem %s3, %s663
        %p665 = scmp.lt.s32.totalorder %s36, 3
        %s666 = scalar_select %p665, %s36, 3
        %s667 = scalar_lea.vmem %s4, %s666
        %p668 = scmp.lt.s32.totalorder %s36, 3
        %s669 = scalar_select %p668, %s36, 3
        %s670 = smul.addr %s669, 16
        %s671 = smul.addr %s670, 4
        %s672 = scalar_lea.vmem %s5, %s671
        %p673 = scmp.lt.s32.totalorder %s36, 3
        %s674 = scalar_select %p673, %s36, 3
        %s675 = scalar_lea.vmem %s6, %s674
        %p676 = scmp.lt.s32.totalorder %s36, 3
        %s677 = scalar_select %p676, %s36, 3
        %s678 = smul.addr %s677, 4
        %s679 = smul.addr %s678, 4
        %s680 = scalar_lea.vmem %s7, %s679
        %v682 = vld [vmem:[%s651] sm:$0xff]
        %v683 = vld [vmem:[%s651 + $0x8] sm:$0xff]
        %v684 = vpack.c.bf16 %v683, %v682
        %p685 = scmp.eq.s32.totalorder %s36, 0
        // Predicated region
        $region89: #{tpu_custom_call.1} parent=87 // pred_check
          %p686 = pneg %p685
        $region90: #{tpu_custom_call.1} parent=87 // pred_check_branch
          %688 = sbr.rel (%p686) target = $region92
        $region91: #{tpu_custom_call.1} parent=87 // pred_region
          %689 = vst [vmem:[#allocation2] sm:$0xff] 0.0
          %690 = vst [vmem:[#allocation2 + $0x8] sm:$0xff] 0.0
        $region92: #{tpu_custom_call.1} parent=87 // pred_fallthru
          _
        %v691 = vld [vmem:[%s656] sm:$0xf]
        %v692 = vld [vmem:[%s656 + $0x4] sm:$0xf]
        %v693 = vld [vmem:[%s656 + $0x8] sm:$0xf]
        %v694 = vld [vmem:[%s656 + $0xc] sm:$0xf]
        %v695 = vld [vmem:[%s656 + $0x10] sm:$0xf]
        %v696 = vld [vmem:[%s656 + $0x14] sm:$0xf]
        %v697 = vld [vmem:[%s656 + $0x18] sm:$0xf]
        %v698 = vld [vmem:[%s656 + $0x1c] sm:$0xf]
        %v699 = vld [vmem:[%s656 + $0x20] sm:$0xf]
        %v700 = vld [vmem:[%s656 + $0x24] sm:$0xf]
        %v701 = vld [vmem:[%s656 + $0x28] sm:$0xf]
        %v702 = vld [vmem:[%s656 + $0x2c] sm:$0xf]
        %v703 = vld [vmem:[%s656 + $0x30] sm:$0xf]
        %v704 = vld [vmem:[%s656 + $0x34] sm:$0xf]
        %v705 = vld [vmem:[%s656 + $0x38] sm:$0xf]
        %v706 = vld [vmem:[%s656 + $0x3c] sm:$0xf]
        %v707 = vld [vmem:[%s659] sm:$0x1]
        %v709 = vlaneseq
        %v710 = vshrl.u32 %v709, 7
        %v711 = vsub.s32 0, %v710
        %v712 = vrot.slane %v707, %v711
        %v730 = vunpack.c.l.b16 %v691
        %v731 = vunpack.c.l.b16 %v692
        %v732 = vunpack.c.l.b16 %v693
        %v733 = vunpack.c.l.b16 %v694
        %v734 = vunpack.c.l.b16 %v695
        %v735 = vunpack.c.l.b16 %v696
        %v736 = vunpack.c.l.b16 %v697
        %v737 = vunpack.c.l.b16 %v698
        %v738 = vunpack.c.l.b16 %v699
        %v739 = vunpack.c.l.b16 %v700
        %v740 = vunpack.c.l.b16 %v701
        %v741 = vunpack.c.l.b16 %v702
        %v742 = vunpack.c.l.b16 %v703
        %v743 = vunpack.c.l.b16 %v704
        %v744 = vunpack.c.l.b16 %v705
        %v745 = vunpack.c.l.b16 %v706
        %v746 = vpack.c.b16 %v731, %v730
        %v747 = vpack.c.b16 %v733, %v732
        %v748 = vpack.c.b16 %v735, %v734
        %v749 = vpack.c.b16 %v737, %v736
        %v750 = vpack.c.b16 %v739, %v738
        %v751 = vpack.c.b16 %v741, %v740
        %v752 = vpack.c.b16 %v743, %v742
        %v753 = vpack.c.b16 %v745, %v744
        %762 = vmatprep.subr.bf16.mxu0 0
        %763 = vmatpush1.bf16.msra.mxu0 %v753
        %764 = vmatprep.subr.bf16.mxu0 0
        %765 = vmatpush1.bf16.msra.mxu0 %v752
        %766 = vmatprep.subr.bf16.mxu0 0
        %767 = vmatpush1.bf16.msra.mxu0 %v751
        %768 = vmatprep.subr.bf16.mxu0 0
        %769 = vmatpush1.bf16.msra.mxu0 %v750
        %770 = vmatprep.subr.bf16.mxu0 0
        %771 = vmatpush1.bf16.msra.mxu0 %v749
        %772 = vmatprep.subr.bf16.mxu0 0
        %773 = vmatpush1.bf16.msra.mxu0 %v748
        %774 = vmatprep.subr.bf16.mxu0 0
        %775 = vmatpush1.bf16.msra.mxu0 %v747
        %776 = vmatprep.subr.bf16.mxu0 0
        %777 = vmatpush1.bf16.msra.mxu0 %v746
        %778 = vmatprep.subr.bf16.mxu0 0
        %779 = vmatpush2.bf16.msra.mxu0 0
        %780 = vmatprep.subr.bf16.mxu0 0
        %781 = vmatpush2.bf16.msra.mxu0 0
        %782 = vmatprep.subr.bf16.mxu0 0
        %783 = vmatpush2.bf16.msra.mxu0 0
        %784 = vmatprep.subr.bf16.mxu0 0
        %785 = vmatpush2.bf16.msra.mxu0 0
        %786 = vmatprep.subr.bf16.mxu0 0
        %787 = vmatpush2.bf16.msra.mxu0 0
        %788 = vmatprep.subr.bf16.mxu0 0
        %789 = vmatpush2.bf16.msra.mxu0 0
        %790 = vmatprep.subr.bf16.mxu0 0
        %791 = vmatpush2.bf16.msra.mxu0 0
        %792 = vmatprep.subr.bf16.mxu0 0
        %793 = vmatpush2.bf16.msra.mxu0 0
        %794 = vmatprep.mubr.bf16.mxu0 0
        %795 = vmatmul.mubr.bf16.gmra.mxu0 %v684
        %v796 = vpop.f32.mrf.mxu0
        %v797 = vadd.f32 %v712, %v796
        %v798 = vpop.f32.mrf.mxu0
        %v799 = vpop.f32.mrf.mxu0
        %v800 = vadd.f32 %v712, %v799
        %v801 = vpop.f32.mrf.mxu0
        %802 = vdwg.mxu0
        %v803 = vld [vmem:[%s664] sm:$0xf]
        %v804 = vld [vmem:[%s664 + $0x4] sm:$0xf]
        %v805 = vld [vmem:[%s664 + $0x8] sm:$0xf]
        %v806 = vld [vmem:[%s664 + $0xc] sm:$0xf]
        %v807 = vld [vmem:[%s664 + $0x10] sm:$0xf]
        %v808 = vld [vmem:[%s664 + $0x14] sm:$0xf]
        %v809 = vld [vmem:[%s664 + $0x18] sm:$0xf]
        %v810 = vld [vmem:[%s664 + $0x1c] sm:$0xf]
        %v811 = vld [vmem:[%s664 + $0x20] sm:$0xf]
        %v812 = vld [vmem:[%s664 + $0x24] sm:$0xf]
        %v813 = vld [vmem:[%s664 + $0x28] sm:$0xf]
        %v814 = vld [vmem:[%s664 + $0x2c] sm:$0xf]
        %v815 = vld [vmem:[%s664 + $0x30] sm:$0xf]
        %v816 = vld [vmem:[%s664 + $0x34] sm:$0xf]
        %v817 = vld [vmem:[%s664 + $0x38] sm:$0xf]
        %v818 = vld [vmem:[%s664 + $0x3c] sm:$0xf]
        %v819 = vld [vmem:[%s667] sm:$0x1]
        %v821 = vlaneseq
        %v822 = vshrl.u32 %v821, 7
        %v823 = vsub.s32 0, %v822
        %v824 = vrot.slane %v819, %v823
        %v842 = vunpack.c.l.b16 %v803
        %v843 = vunpack.c.l.b16 %v804
        %v844 = vunpack.c.l.b16 %v805
        %v845 = vunpack.c.l.b16 %v806
        %v846 = vunpack.c.l.b16 %v807
        %v847 = vunpack.c.l.b16 %v808
        %v848 = vunpack.c.l.b16 %v809
        %v849 = vunpack.c.l.b16 %v810
        %v850 = vunpack.c.l.b16 %v811
        %v851 = vunpack.c.l.b16 %v812
        %v852 = vunpack.c.l.b16 %v813
        %v853 = vunpack.c.l.b16 %v814
        %v854 = vunpack.c.l.b16 %v815
        %v855 = vunpack.c.l.b16 %v816
        %v856 = vunpack.c.l.b16 %v817
        %v857 = vunpack.c.l.b16 %v818
        %v858 = vpack.c.b16 %v843, %v842
        %v859 = vpack.c.b16 %v845, %v844
        %v860 = vpack.c.b16 %v847, %v846
        %v861 = vpack.c.b16 %v849, %v848
        %v862 = vpack.c.b16 %v851, %v850
        %v863 = vpack.c.b16 %v853, %v852
        %v864 = vpack.c.b16 %v855, %v854
        %v865 = vpack.c.b16 %v857, %v856
        %874 = vmatprep.subr.bf16.mxu0 0
        %875 = vmatpush1.bf16.msra.mxu0 %v865
        %876 = vmatprep.subr.bf16.mxu0 0
        %877 = vmatpush1.bf16.msra.mxu0 %v864
        %878 = vmatprep.subr.bf16.mxu0 0
        %879 = vmatpush1.bf16.msra.mxu0 %v863
        %880 = vmatprep.subr.bf16.mxu0 0
        %881 = vmatpush1.bf16.msra.mxu0 %v862
        %882 = vmatprep.subr.bf16.mxu0 0
        %883 = vmatpush1.bf16.msra.mxu0 %v861
        %884 = vmatprep.subr.bf16.mxu0 0
        %885 = vmatpush1.bf16.msra.mxu0 %v860
        %886 = vmatprep.subr.bf16.mxu0 0
        %887 = vmatpush1.bf16.msra.mxu0 %v859
        %888 = vmatprep.subr.bf16.mxu0 0
        %889 = vmatpush1.bf16.msra.mxu0 %v858
        %890 = vmatprep.subr.bf16.mxu0 0
        %891 = vmatpush2.bf16.msra.mxu0 0
        %892 = vmatprep.subr.bf16.mxu0 0
        %893 = vmatpush2.bf16.msra.mxu0 0
        %894 = vmatprep.subr.bf16.mxu0 0
        %895 = vmatpush2.bf16.msra.mxu0 0
        %896 = vmatprep.subr.bf16.mxu0 0
        %897 = vmatpush2.bf16.msra.mxu0 0
        %898 = vmatprep.subr.bf16.mxu0 0
        %899 = vmatpush2.bf16.msra.mxu0 0
        %900 = vmatprep.subr.bf16.mxu0 0
        %901 = vmatpush2.bf16.msra.mxu0 0
        %902 = vmatprep.subr.bf16.mxu0 0
        %903 = vmatpush2.bf16.msra.mxu0 0
        %904 = vmatprep.subr.bf16.mxu0 0
        %905 = vmatpush2.bf16.msra.mxu0 0
        %906 = vmatprep.mubr.bf16.mxu0 0
        %907 = vmatmul.mubr.bf16.gmra.mxu0 %v684
        %v908 = vpop.f32.mrf.mxu0
        %v909 = vadd.f32 %v824, %v908
        %v910 = vpop.f32.mrf.mxu0
        %v911 = vpop.f32.mrf.mxu0
        %v912 = vadd.f32 %v824, %v911
        %v913 = vpop.f32.mrf.mxu0
        %914 = vdwg.mxu0
        %v915 = vld [vmem:[%s672] sm:$0xf]
        %v916 = vld [vmem:[%s672 + $0x4] sm:$0xf]
        %v917 = vld [vmem:[%s672 + $0x8] sm:$0xf]
        %v918 = vld [vmem:[%s672 + $0xc] sm:$0xf]
        %v919 = vld [vmem:[%s672 + $0x10] sm:$0xf]
        %v920 = vld [vmem:[%s672 + $0x14] sm:$0xf]
        %v921 = vld [vmem:[%s672 + $0x18] sm:$0xf]
        %v922 = vld [vmem:[%s672 + $0x1c] sm:$0xf]
        %v923 = vld [vmem:[%s672 + $0x20] sm:$0xf]
        %v924 = vld [vmem:[%s672 + $0x24] sm:$0xf]
        %v925 = vld [vmem:[%s672 + $0x28] sm:$0xf]
        %v926 = vld [vmem:[%s672 + $0x2c] sm:$0xf]
        %v927 = vld [vmem:[%s672 + $0x30] sm:$0xf]
        %v928 = vld [vmem:[%s672 + $0x34] sm:$0xf]
        %v929 = vld [vmem:[%s672 + $0x38] sm:$0xf]
        %v930 = vld [vmem:[%s672 + $0x3c] sm:$0xf]
        %v931 = vld [vmem:[%s675] sm:$0x1]
        %v933 = vlaneseq
        %v934 = vshrl.u32 %v933, 7
        %v935 = vsub.s32 0, %v934
        %v936 = vrot.slane %v931, %v935
        %v954 = vunpack.c.l.b16 %v915
        %v955 = vunpack.c.l.b16 %v916
        %v956 = vunpack.c.l.b16 %v917
        %v957 = vunpack.c.l.b16 %v918
        %v958 = vunpack.c.l.b16 %v919
        %v959 = vunpack.c.l.b16 %v920
        %v960 = vunpack.c.l.b16 %v921
        %v961 = vunpack.c.l.b16 %v922
        %v962 = vunpack.c.l.b16 %v923
        %v963 = vunpack.c.l.b16 %v924
        %v964 = vunpack.c.l.b16 %v925
        %v965 = vunpack.c.l.b16 %v926
        %v966 = vunpack.c.l.b16 %v927
        %v967 = vunpack.c.l.b16 %v928
        %v968 = vunpack.c.l.b16 %v929
        %v969 = vunpack.c.l.b16 %v930
        %v970 = vpack.c.b16 %v955, %v954
        %v971 = vpack.c.b16 %v957, %v956
        %v972 = vpack.c.b16 %v959, %v958
        %v973 = vpack.c.b16 %v961, %v960
        %v974 = vpack.c.b16 %v963, %v962
        %v975 = vpack.c.b16 %v965, %v964
        %v976 = vpack.c.b16 %v967, %v966
        %v977 = vpack.c.b16 %v969, %v968
        %986 = vmatprep.subr.bf16.mxu0 0
        %987 = vmatpush1.bf16.msra.mxu0 %v977
        %988 = vmatprep.subr.bf16.mxu0 0
        %989 = vmatpush1.bf16.msra.mxu0 %v976
        %990 = vmatprep.subr.bf16.mxu0 0
        %991 = vmatpush1.bf16.msra.mxu0 %v975
        %992 = vmatprep.subr.bf16.mxu0 0
        %993 = vmatpush1.bf16.msra.mxu0 %v974
        %994 = vmatprep.subr.bf16.mxu0 0
        %995 = vmatpush1.bf16.msra.mxu0 %v973
        %996 = vmatprep.subr.bf16.mxu0 0
        %997 = vmatpush1.bf16.msra.mxu0 %v972
        %998 = vmatprep.subr.bf16.mxu0 0
        %999 = vmatpush1.bf16.msra.mxu0 %v971
        %1000 = vmatprep.subr.bf16.mxu0 0
        %1001 = vmatpush1.bf16.msra.mxu0 %v970
        %1002 = vmatprep.subr.bf16.mxu0 0
        %1003 = vmatpush2.bf16.msra.mxu0 0
        %1004 = vmatprep.subr.bf16.mxu0 0
        %1005 = vmatpush2.bf16.msra.mxu0 0
        %1006 = vmatprep.subr.bf16.mxu0 0
        %1007 = vmatpush2.bf16.msra.mxu0 0
        %1008 = vmatprep.subr.bf16.mxu0 0
        %1009 = vmatpush2.bf16.msra.mxu0 0
        %1010 = vmatprep.subr.bf16.mxu0 0
        %1011 = vmatpush2.bf16.msra.mxu0 0
        %1012 = vmatprep.subr.bf16.mxu0 0
        %1013 = vmatpush2.bf16.msra.mxu0 0
        %1014 = vmatprep.subr.bf16.mxu0 0
        %1015 = vmatpush2.bf16.msra.mxu0 0
        %1016 = vmatprep.subr.bf16.mxu0 0
        %1017 = vmatpush2.bf16.msra.mxu0 0
        %1018 = vmatprep.mubr.bf16.mxu0 0
        %1019 = vmatmul.mubr.bf16.gmra.mxu0 %v684
        %v1020 = vpop.f32.mrf.mxu0
        %v1021 = vadd.f32 %v936, %v1020
        %v1022 = vpop.f32.mrf.mxu0
        %v1023 = vpop.f32.mrf.mxu0
        %v1024 = vadd.f32 %v936, %v1023
        %v1025 = vpop.f32.mrf.mxu0
        %1026 = vdwg.mxu0
        %v1027 = vpack.c.bf16 %v800, %v797
        %v1028 = vpack.c.bf16 %v912, %v909
        %vm1029 = vcmask 261120
        %v1031 = vsel %vm1029, %v1027, 0
        %v1034 = vsel %vm1029, %v1028, 0
        %1036 = vmatprep.subr.bf16.mxu0 0
        %1037 = vmatpush1.bf16.xpose.msra.mxu0 0
        %1038 = vmatprep.subr.bf16.mxu0 0
        %1039 = vmatpush1.bf16.xpose.msra.mxu0 0
        %1040 = vmatprep.subr.bf16.mxu0 0
        %1041 = vmatpush1.bf16.xpose.msra.mxu0 0
        %1042 = vmatprep.subr.bf16.mxu0 0
        %1043 = vmatpush1.bf16.xpose.msra.mxu0 0
        %1044 = vmatprep.subr.bf16.mxu0 0
        %1045 = vmatpush1.bf16.xpose.msra.mxu0 0
        %1046 = vmatprep.subr.bf16.mxu0 0
        %1047 = vmatpush1.bf16.xpose.msra.mxu0 0
        %1048 = vmatprep.subr.bf16.mxu0 0
        %1049 = vmatpush1.bf16.xpose.msra.mxu0 0
        %1050 = vmatprep.subr.bf16.mxu0 0
        %1051 = vmatpush1.bf16.xpose.msra.mxu0 %v1034
        %1052 = vmatprep.subr.bf16.mxu0 0
        %1053 = vmatpush2.bf16.xpose.msra.mxu0 0
        %1054 = vmatprep.subr.bf16.mxu0 0
        %1055 = vmatpush2.bf16.xpose.msra.mxu0 0
        %1056 = vmatprep.subr.bf16.mxu0 0
        %1057 = vmatpush2.bf16.xpose.msra.mxu0 0
        %1058 = vmatprep.subr.bf16.mxu0 0
        %1059 = vmatpush2.bf16.xpose.msra.mxu0 0
        %1060 = vmatprep.subr.bf16.mxu0 0
        %1061 = vmatpush2.bf16.xpose.msra.mxu0 0
        %1062 = vmatprep.subr.bf16.mxu0 0
        %1063 = vmatpush2.bf16.xpose.msra.mxu0 0
        %1064 = vmatprep.subr.bf16.mxu0 0
        %1065 = vmatpush2.bf16.xpose.msra.mxu0 0
        %1066 = vmatprep.subr.bf16.mxu0 0
        %1067 = vmatpush2.bf16.xpose.msra.mxu0 0
        %1068 = vmatprep.mubr.bf16.mxu0 0
        %1069 = vmatmul.mubr.bf16.gmra.mxu0 %v1031
        %v1070 = vpop.f32.mrf.mxu0
        %v1071 = vadd.f32 0.0, %v1070
        %v1072 = vpop.f32.mrf.mxu0
        %v1073 = vpop.f32.mrf.mxu0
        %v1074 = vadd.f32 0.0, %v1073
        %v1075 = vpop.f32.mrf.mxu0
        %1076 = vdwg.mxu0
        %vm1077 = vcmask 130048
        %v1078 = vsel %vm1077, %v1071, -inf
        %1079 = vmax.xlane.f32.xlu0 %v1078
        %v1080 = vpop.xlane.xlu0 %1079
        %v1081 = vsel %vm1077, %v1074, -inf
        %1082 = vmax.xlane.f32.xlu0 %v1081
        %v1083 = vpop.xlane.xlu0 %1082
        %v1084 = vsub.f32 %v1071, %v1080
        %v1085 = vsub.f32 %v1074, %v1083
        %v1086 = vmul.f32 %v1084, 1.442695
        %v1087 = vpow.pop %v1086
        %v1088 = vmul.f32 %v1085, 1.442695
        %v1089 = vpow.pop %v1088
        %v1090 = vsel %vm1077, %v1087, 0.0
        %1091 = vadd.xlane.f32.xlu0 %v1090
        %v1092 = vpop.xlane.xlu0 %1091
        %v1093 = vsel %vm1077, %v1089, 0.0
        %1094 = vadd.xlane.f32.xlu0 %v1093
        %v1095 = vpop.xlane.xlu0 %1094
        %v1096 = vrcp.pop %v1092
        %v1097 = vrcp.pop %v1095
        %v1098 = vmul.f32 %v1087, %v1096
        %v1099 = vmul.f32 %v1089, %v1097
        %v1100 = vpack.c.bf16 %v1099, %v1098
        %v1101 = vpack.c.bf16 %v1024, %v1021
        %v1103 = vsel %vm1077, %v1100, 0
        %1105 = vmatprep.subr.bf16.mxu0 0
        %1106 = vmatpush1.bf16.msra.mxu0 0
        %1107 = vmatprep.subr.bf16.mxu0 0
        %1108 = vmatpush1.bf16.msra.mxu0 0
        %1109 = vmatprep.subr.bf16.mxu0 0
        %1110 = vmatpush1.bf16.msra.mxu0 0
        %1111 = vmatprep.subr.bf16.mxu0 0
        %1112 = vmatpush1.bf16.msra.mxu0 0
        %1113 = vmatprep.subr.bf16.mxu0 0
        %1114 = vmatpush1.bf16.msra.mxu0 0
        %1115 = vmatprep.subr.bf16.mxu0 0
        %1116 = vmatpush1.bf16.msra.mxu0 0
        %1117 = vmatprep.subr.bf16.mxu0 0
        %1118 = vmatpush1.bf16.msra.mxu0 0
        %1119 = vmatprep.subr.bf16.mxu0 0
        %1120 = vmatpush1.bf16.msra.mxu0 %v1101
        %1121 = vmatprep.subr.bf16.mxu0 0
        %1122 = vmatpush2.bf16.msra.mxu0 0
        %1123 = vmatprep.subr.bf16.mxu0 0
        %1124 = vmatpush2.bf16.msra.mxu0 0
        %1125 = vmatprep.subr.bf16.mxu0 0
        %1126 = vmatpush2.bf16.msra.mxu0 0
        %1127 = vmatprep.subr.bf16.mxu0 0
        %1128 = vmatpush2.bf16.msra.mxu0 0
        %1129 = vmatprep.subr.bf16.mxu0 0
        %1130 = vmatpush2.bf16.msra.mxu0 0
        %1131 = vmatprep.subr.bf16.mxu0 0
        %1132 = vmatpush2.bf16.msra.mxu0 0
        %1133 = vmatprep.subr.bf16.mxu0 0
        %1134 = vmatpush2.bf16.msra.mxu0 0
        %1135 = vmatprep.subr.bf16.mxu0 0
        %1136 = vmatpush2.bf16.msra.mxu0 0
        %1137 = vmatprep.mubr.bf16.mxu0 0
        %1138 = vmatmul.mubr.bf16.gmra.mxu0 %v1103
        %v1139 = vpop.f32.mrf.mxu0
        %v1140 = vadd.f32 0.0, %v1139
        %v1141 = vpop.f32.mrf.mxu0
        %v1142 = vpop.f32.mrf.mxu0
        %v1143 = vadd.f32 0.0, %v1142
        %v1144 = vpop.f32.mrf.mxu0
        %1145 = vdwg.mxu0
        %v1146 = vld [vmem:[#allocation2] sm:$0xff]
        %v1147 = vld [vmem:[#allocation2 + $0x8] sm:$0xff]
        %v1148 = vpack.c.bf16 %v1143, %v1140
        %v1149 = vld [vmem:[%s680] sm:$0xf]
        %v1150 = vld [vmem:[%s680 + $0x4] sm:$0xf]
        %v1151 = vld [vmem:[%s680 + $0x8] sm:$0xf]
        %v1152 = vld [vmem:[%s680 + $0xc] sm:$0xf]
        %v1157 = vunpack.c.l.b16 %v1149
        %v1158 = vunpack.c.l.b16 %v1150
        %v1159 = vunpack.c.l.b16 %v1151
        %v1160 = vunpack.c.l.b16 %v1152
        %v1161 = vpack.c.b16 %v1158, %v1157
        %v1162 = vpack.c.b16 %v1160, %v1159
        %v1166 = vsel %vm1029, %v1148, 0
        %1168 = vmatprep.subr.bf16.mxu0 0
        %1169 = vmatpush1.bf16.msra.mxu0 0
        %1170 = vmatprep.subr.bf16.mxu0 0
        %1171 = vmatpush1.bf16.msra.mxu0 0
        %1172 = vmatprep.subr.bf16.mxu0 0
        %1173 = vmatpush1.bf16.msra.mxu0 0
        %1174 = vmatprep.subr.bf16.mxu0 0
        %1175 = vmatpush1.bf16.msra.mxu0 0
        %1176 = vmatprep.subr.bf16.mxu0 0
        %1177 = vmatpush1.bf16.msra.mxu0 0
        %1178 = vmatprep.subr.bf16.mxu0 0
        %1179 = vmatpush1.bf16.msra.mxu0 0
        %1180 = vmatprep.subr.bf16.mxu0 0
        %1181 = vmatpush1.bf16.msra.mxu0 %v1162
        %1182 = vmatprep.subr.bf16.mxu0 0
        %1183 = vmatpush1.bf16.msra.mxu0 %v1161
        %1184 = vmatprep.subr.bf16.mxu0 0
        %1185 = vmatpush2.bf16.msra.mxu0 0
        %1186 = vmatprep.subr.bf16.mxu0 0
        %1187 = vmatpush2.bf16.msra.mxu0 0
        %1188 = vmatprep.subr.bf16.mxu0 0
        %1189 = vmatpush2.bf16.msra.mxu0 0
        %1190 = vmatprep.subr.bf16.mxu0 0
        %1191 = vmatpush2.bf16.msra.mxu0 0
        %1192 = vmatprep.subr.bf16.mxu0 0
        %1193 = vmatpush2.bf16.msra.mxu0 0
        %1194 = vmatprep.subr.bf16.mxu0 0
        %1195 = vmatpush2.bf16.msra.mxu0 0
        %1196 = vmatprep.subr.bf16.mxu0 0
        %1197 = vmatpush2.bf16.msra.mxu0 0
        %1198 = vmatprep.subr.bf16.mxu0 0
        %1199 = vmatpush2.bf16.msra.mxu0 0
        %1200 = vmatprep.mubr.bf16.mxu0 0
        %1201 = vmatmul.mubr.bf16.gmra.mxu0 %v1166
        %v1202 = vpop.f32.mrf.mxu0
        %v1203 = vadd.f32 0.0, %v1202
        %v1204 = vpop.f32.mrf.mxu0
        %v1205 = vpop.f32.mrf.mxu0
        %v1206 = vadd.f32 0.0, %v1205
        %v1207 = vpop.f32.mrf.mxu0
        %1208 = vdwg.mxu0
        %v1209 = vadd.f32 %v1146, %v1203
        %v1210 = vadd.f32 %v1147, %v1206
        %1211 = vst [vmem:[#allocation2] sm:$0xff] %v1209
        %1212 = vst [vmem:[#allocation2 + $0x8] sm:$0xff] %v1210
        %p1213 = scmp.eq.s32.totalorder %s36, 3
        // Predicated region
        $region93: #{tpu_custom_call.1} parent=87 // pred_check
          %p1214 = pneg %p1213
        $region94: #{tpu_custom_call.1} parent=87 // pred_check_branch
          %1216 = sbr.rel (%p1214) target = $region96
        $region95: #{tpu_custom_call.1} parent=87 // pred_region
          %v1217 = vld [vmem:[#allocation2] sm:$0xff]
          %v1218 = vld [vmem:[#allocation2 + $0x8] sm:$0xff]
          %v1219 = vld [vmem:[%s8] sm:$0x1]
          %v1221 = vlaneseq
          %v1222 = vshrl.u32 %v1221, 7
          %v1223 = vsub.s32 0, %v1222
          %v1224 = vrot.slane %v1219, %v1223
          %v1226 = vadd.f32 %v1217, %v1224
          %v1227 = vadd.f32 %v1218, %v1224
          %v1228 = vadd.f32 %v682, %v1226
          %v1229 = vadd.f32 %v683, %v1227
          %1230 = vadd.xlane.f32.xlu0 %v1228
          %v1231 = vpop.xlane.xlu0 %1230
          %1232 = vadd.xlane.f32.xlu0 %v1229
          %v1233 = vpop.xlane.xlu0 %1232
          %v1234 = vrcp.pop 128.0
          %v1235 = vmul.f32 %v1231, %v1234
          %v1236 = vmul.f32 %v1233, %v1234
          %v1237 = vsub.f32 %v1228, %v1235
          %v1238 = vsub.f32 %v1229, %v1236
          %v1239 = vmul.f32 %v1237, %v1237
          %v1240 = vmul.f32 %v1238, %v1238
          %1241 = vadd.xlane.f32.xlu0 %v1239
          %v1242 = vpop.xlane.xlu0 %1241
          %1243 = vadd.xlane.f32.xlu0 %v1240
          %v1244 = vpop.xlane.xlu0 %1243
          %v1245 = vmul.f32 %v1242, %v1234
          %v1246 = vmul.f32 %v1244, %v1234
          %v1247 = vadd.f32 %v1245, 1e-05
          %v1248 = vadd.f32 %v1246, 1e-05
          %v1249 = vrsqrt.pop %v1247
          %v1250 = vrsqrt.pop %v1248
          %v1251 = vmul.f32 %v1237, %v1249
          %v1252 = vmul.f32 %v1238, %v1250
          %v1253 = vld [vmem:[%s13] sm:$0x1]
          %v1255 = vlaneseq
          %v1256 = vshrl.u32 %v1255, 7
          %v1257 = vsub.s32 0, %v1256
          %v1258 = vrot.slane %v1253, %v1257
          %v1260 = vmul.f32 %v1251, %v1258
          %v1261 = vmul.f32 %v1252, %v1258
          %v1262 = vld [vmem:[%s14] sm:$0x1]
          %v1264 = vlaneseq
          %v1265 = vshrl.u32 %v1264, 7
          %v1266 = vsub.s32 0, %v1265
          %v1267 = vrot.slane %v1262, %v1266
          %v1269 = vadd.f32 %v1260, %v1267
          %v1270 = vadd.f32 %v1261, %v1267
          %v1271 = vpack.c.bf16 %v1270, %v1269
          %v1272 = vld [vmem:[%s9] sm:$0xff]
          %v1273 = vld [vmem:[%s9 + $0x8] sm:$0xff]
          %v1274 = vld [vmem:[%s9 + $0x10] sm:$0xff]
          %v1275 = vld [vmem:[%s9 + $0x18] sm:$0xff]
          %v1276 = vld [vmem:[%s9 + $0x20] sm:$0xff]
          %v1277 = vld [vmem:[%s9 + $0x28] sm:$0xff]
          %v1278 = vld [vmem:[%s9 + $0x30] sm:$0xff]
          %v1279 = vld [vmem:[%s9 + $0x38] sm:$0xff]
          %v1280 = vld [vmem:[%s9 + $0x40] sm:$0xff]
          %v1281 = vld [vmem:[%s9 + $0x48] sm:$0xff]
          %v1282 = vld [vmem:[%s9 + $0x50] sm:$0xff]
          %v1283 = vld [vmem:[%s9 + $0x58] sm:$0xff]
          %v1284 = vld [vmem:[%s9 + $0x60] sm:$0xff]
          %v1285 = vld [vmem:[%s9 + $0x68] sm:$0xff]
          %v1286 = vld [vmem:[%s9 + $0x70] sm:$0xff]
          %v1287 = vld [vmem:[%s9 + $0x78] sm:$0xff]
          %v1288 = vld [vmem:[%s10] sm:$0x3]
          %v1290 = vlaneseq
          %v1291 = vshrl.u32 %v1290, 7
          %v1292 = vsub.s32 0, %v1291
          %v1293 = vrot.slane %v1288, %v1292
          %v1294 = vlaneseq
          %v1295 = vshrl.u32 %v1294, 7
          %v1296 = vsub.s32 1, %v1295
          %v1297 = vrot.slane %v1288, %v1296
          %v1316 = vunpack.c.l.b16 %v1272
          %v1317 = vunpack.c.h.b16 %v1272
          %v1318 = vunpack.c.l.b16 %v1273
          %v1319 = vunpack.c.h.b16 %v1273
          %v1320 = vunpack.c.l.b16 %v1274
          %v1321 = vunpack.c.h.b16 %v1274
          %v1322 = vunpack.c.l.b16 %v1275
          %v1323 = vunpack.c.h.b16 %v1275
          %v1324 = vunpack.c.l.b16 %v1276
          %v1325 = vunpack.c.h.b16 %v1276
          %v1326 = vunpack.c.l.b16 %v1277
          %v1327 = vunpack.c.h.b16 %v1277
          %v1328 = vunpack.c.l.b16 %v1278
          %v1329 = vunpack.c.h.b16 %v1278
          %v1330 = vunpack.c.l.b16 %v1279
          %v1331 = vunpack.c.h.b16 %v1279
          %v1332 = vunpack.c.l.b16 %v1280
          %v1333 = vunpack.c.h.b16 %v1280
          %v1334 = vunpack.c.l.b16 %v1281
          %v1335 = vunpack.c.h.b16 %v1281
          %v1336 = vunpack.c.l.b16 %v1282
          %v1337 = vunpack.c.h.b16 %v1282
          %v1338 = vunpack.c.l.b16 %v1283
          %v1339 = vunpack.c.h.b16 %v1283
          %v1340 = vunpack.c.l.b16 %v1284
          %v1341 = vunpack.c.h.b16 %v1284
          %v1342 = vunpack.c.l.b16 %v1285
          %v1343 = vunpack.c.h.b16 %v1285
          %v1344 = vunpack.c.l.b16 %v1286
          %v1345 = vunpack.c.h.b16 %v1286
          %v1346 = vunpack.c.l.b16 %v1287
          %v1347 = vunpack.c.h.b16 %v1287
          %v1348 = vpack.c.b16 %v1318, %v1316
          %v1349 = vpack.c.b16 %v1319, %v1317
          %v1350 = vpack.c.b16 %v1322, %v1320
          %v1351 = vpack.c.b16 %v1323, %v1321
          %v1352 = vpack.c.b16 %v1326, %v1324
          %v1353 = vpack.c.b16 %v1327, %v1325
          %v1354 = vpack.c.b16 %v1330, %v1328
          %v1355 = vpack.c.b16 %v1331, %v1329
          %v1356 = vpack.c.b16 %v1334, %v1332
          %v1357 = vpack.c.b16 %v1335, %v1333
          %v1358 = vpack.c.b16 %v1338, %v1336
          %v1359 = vpack.c.b16 %v1339, %v1337
          %v1360 = vpack.c.b16 %v1342, %v1340
          %v1361 = vpack.c.b16 %v1343, %v1341
          %v1362 = vpack.c.b16 %v1346, %v1344
          %v1363 = vpack.c.b16 %v1347, %v1345
          %1380 = vmatprep.subr.bf16.mxu0 %v1363
          %1381 = vmatpush1.bf16.msra.mxu0 %v1362
          %1382 = vmatprep.subr.bf16.mxu0 %v1361
          %1383 = vmatpush1.bf16.msra.mxu0 %v1360
          %1384 = vmatprep.subr.bf16.mxu0 %v1359
          %1385 = vmatpush1.bf16.msra.mxu0 %v1358
          %1386 = vmatprep.subr.bf16.mxu0 %v1357
          %1387 = vmatpush1.bf16.msra.mxu0 %v1356
          %1388 = vmatprep.subr.bf16.mxu0 %v1355
          %1389 = vmatpush1.bf16.msra.mxu0 %v1354
          %1390 = vmatprep.subr.bf16.mxu0 %v1353
          %1391 = vmatpush1.bf16.msra.mxu0 %v1352
          %1392 = vmatprep.subr.bf16.mxu0 %v1351
          %1393 = vmatpush1.bf16.msra.mxu0 %v1350
          %1394 = vmatprep.subr.bf16.mxu0 %v1349
          %1395 = vmatpush1.bf16.msra.mxu0 %v1348
          %1396 = vmatprep.subr.bf16.mxu0 0
          %1397 = vmatpush2.bf16.msra.mxu0 0
          %1398 = vmatprep.subr.bf16.mxu0 0
          %1399 = vmatpush2.bf16.msra.mxu0 0
          %1400 = vmatprep.subr.bf16.mxu0 0
          %1401 = vmatpush2.bf16.msra.mxu0 0
          %1402 = vmatprep.subr.bf16.mxu0 0
          %1403 = vmatpush2.bf16.msra.mxu0 0
          %1404 = vmatprep.subr.bf16.mxu0 0
          %1405 = vmatpush2.bf16.msra.mxu0 0
          %1406 = vmatprep.subr.bf16.mxu0 0
          %1407 = vmatpush2.bf16.msra.mxu0 0
          %1408 = vmatprep.subr.bf16.mxu0 0
          %1409 = vmatpush2.bf16.msra.mxu0 0
          %1410 = vmatprep.subr.bf16.mxu0 0
          %1411 = vmatpush2.bf16.msra.mxu0 0
          %1412 = vmatprep.mubr.bf16.mxu0 0
          %1413 = vmatmul.mubr.bf16.gmra.mxu0 %v1271
          %v1414 = vpop.f32.mrf.mxu0
          %v1415 = vadd.f32 %v1293, %v1414
          %v1416 = vpop.f32.mrf.mxu0
          %v1417 = vadd.f32 %v1297, %v1416
          %v1418 = vpop.f32.mrf.mxu0
          %v1419 = vadd.f32 %v1293, %v1418
          %v1420 = vpop.f32.mrf.mxu0
          %v1421 = vadd.f32 %v1297, %v1420
          %1422 = vdwg.mxu0
          %v1423 = vmax.f32 %v1415, 0.0
          %v1424 = vmax.f32 %v1417, 0.0
          %v1425 = vmax.f32 %v1419, 0.0
          %v1426 = vmax.f32 %v1421, 0.0
          %v1427 = vpack.c.bf16 %v1425, %v1423
          %v1428 = vpack.c.bf16 %v1426, %v1424
          %v1429 = vld [vmem:[%s11] sm:$0xf]
          %v1430 = vld [vmem:[%s11 + $0x4] sm:$0xf]
          %v1431 = vld [vmem:[%s11 + $0x8] sm:$0xf]
          %v1432 = vld [vmem:[%s11 + $0xc] sm:$0xf]
          %v1433 = vld [vmem:[%s11 + $0x10] sm:$0xf]
          %v1434 = vld [vmem:[%s11 + $0x14] sm:$0xf]
          %v1435 = vld [vmem:[%s11 + $0x18] sm:$0xf]
          %v1436 = vld [vmem:[%s11 + $0x1c] sm:$0xf]
          %v1437 = vld [vmem:[%s11 + $0x20] sm:$0xf]
          %v1438 = vld [vmem:[%s11 + $0x24] sm:$0xf]
          %v1439 = vld [vmem:[%s11 + $0x28] sm:$0xf]
          %v1440 = vld [vmem:[%s11 + $0x2c] sm:$0xf]
          %v1441 = vld [vmem:[%s11 + $0x30] sm:$0xf]
          %v1442 = vld [vmem:[%s11 + $0x34] sm:$0xf]
          %v1443 = vld [vmem:[%s11 + $0x38] sm:$0xf]
          %v1444 = vld [vmem:[%s11 + $0x3c] sm:$0xf]
          %v1445 = vld [vmem:[%s11 + $0x40] sm:$0xf]
          %v1446 = vld [vmem:[%s11 + $0x44] sm:$0xf]
          %v1447 = vld [vmem:[%s11 + $0x48] sm:$0xf]
          %v1448 = vld [vmem:[%s11 + $0x4c] sm:$0xf]
          %v1449 = vld [vmem:[%s11 + $0x50] sm:$0xf]
          %v1450 = vld [vmem:[%s11 + $0x54] sm:$0xf]
          %v1451 = vld [vmem:[%s11 + $0x58] sm:$0xf]
          %v1452 = vld [vmem:[%s11 + $0x5c] sm:$0xf]
          %v1453 = vld [vmem:[%s11 + $0x60] sm:$0xf]
          %v1454 = vld [vmem:[%s11 + $0x64] sm:$0xf]
          %v1455 = vld [vmem:[%s11 + $0x68] sm:$0xf]
          %v1456 = vld [vmem:[%s11 + $0x6c] sm:$0xf]
          %v1457 = vld [vmem:[%s11 + $0x70] sm:$0xf]
          %v1458 = vld [vmem:[%s11 + $0x74] sm:$0xf]
          %v1459 = vld [vmem:[%s11 + $0x78] sm:$0xf]
          %v1460 = vld [vmem:[%s11 + $0x7c] sm:$0xf]
          %v1461 = vld [vmem:[%s12] sm:$0x1]
          %v1463 = vlaneseq
          %v1464 = vshrl.u32 %v1463, 7
          %v1465 = vsub.s32 0, %v1464
          %v1466 = vrot.slane %v1461, %v1465
          %v1500 = vunpack.c.l.b16 %v1429
          %v1501 = vunpack.c.l.b16 %v1430
          %v1502 = vunpack.c.l.b16 %v1431
          %v1503 = vunpack.c.l.b16 %v1432
          %v1504 = vunpack.c.l.b16 %v1433
          %v1505 = vunpack.c.l.b16 %v1434
          %v1506 = vunpack.c.l.b16 %v1435
          %v1507 = vunpack.c.l.b16 %v1436
          %v1508 = vunpack.c.l.b16 %v1437
          %v1509 = vunpack.c.l.b16 %v1438
          %v1510 = vunpack.c.l.b16 %v1439
          %v1511 = vunpack.c.l.b16 %v1440
          %v1512 = vunpack.c.l.b16 %v1441
          %v1513 = vunpack.c.l.b16 %v1442
          %v1514 = vunpack.c.l.b16 %v1443
          %v1515 = vunpack.c.l.b16 %v1444
          %v1516 = vunpack.c.l.b16 %v1445
          %v1517 = vunpack.c.l.b16 %v1446
          %v1518 = vunpack.c.l.b16 %v1447
          %v1519 = vunpack.c.l.b16 %v1448
          %v1520 = vunpack.c.l.b16 %v1449
          %v1521 = vunpack.c.l.b16 %v1450
          %v1522 = vunpack.c.l.b16 %v1451
          %v1523 = vunpack.c.l.b16 %v1452
          %v1524 = vunpack.c.l.b16 %v1453
          %v1525 = vunpack.c.l.b16 %v1454
          %v1526 = vunpack.c.l.b16 %v1455
          %v1527 = vunpack.c.l.b16 %v1456
          %v1528 = vunpack.c.l.b16 %v1457
          %v1529 = vunpack.c.l.b16 %v1458
          %v1530 = vunpack.c.l.b16 %v1459
          %v1531 = vunpack.c.l.b16 %v1460
          %v1532 = vpack.c.b16 %v1501, %v1500
          %v1533 = vpack.c.b16 %v1503, %v1502
          %v1534 = vpack.c.b16 %v1505, %v1504
          %v1535 = vpack.c.b16 %v1507, %v1506
          %v1536 = vpack.c.b16 %v1509, %v1508
          %v1537 = vpack.c.b16 %v1511, %v1510
          %v1538 = vpack.c.b16 %v1513, %v1512
          %v1539 = vpack.c.b16 %v1515, %v1514
          %v1540 = vpack.c.b16 %v1517, %v1516
          %v1541 = vpack.c.b16 %v1519, %v1518
          %v1542 = vpack.c.b16 %v1521, %v1520
          %v1543 = vpack.c.b16 %v1523, %v1522
          %v1544 = vpack.c.b16 %v1525, %v1524
          %v1545 = vpack.c.b16 %v1527, %v1526
          %v1546 = vpack.c.b16 %v1529, %v1528
          %v1547 = vpack.c.b16 %v1531, %v1530
          %1564 = vmatprep.subr.bf16.mxu0 0
          %1565 = vmatpush1.bf16.msra.mxu0 %v1539
          %1566 = vmatprep.subr.bf16.mxu0 0
          %1567 = vmatpush1.bf16.msra.mxu0 %v1538
          %1568 = vmatprep.subr.bf16.mxu0 0
          %1569 = vmatpush1.bf16.msra.mxu0 %v1537
          %1570 = vmatprep.subr.bf16.mxu0 0
          %1571 = vmatpush1.bf16.msra.mxu0 %v1536
          %1572 = vmatprep.subr.bf16.mxu0 0
          %1573 = vmatpush1.bf16.msra.mxu0 %v1535
          %1574 = vmatprep.subr.bf16.mxu0 0
          %1575 = vmatpush1.bf16.msra.mxu0 %v1534
          %1576 = vmatprep.subr.bf16.mxu0 0
          %1577 = vmatpush1.bf16.msra.mxu0 %v1533
          %1578 = vmatprep.subr.bf16.mxu0 0
          %1579 = vmatpush1.bf16.msra.mxu0 %v1532
          %1580 = vmatprep.subr.bf16.mxu0 0
          %1581 = vmatpush2.bf16.msra.mxu0 %v1547
          %1582 = vmatprep.subr.bf16.mxu0 0
          %1583 = vmatpush2.bf16.msra.mxu0 %v1546
          %1584 = vmatprep.subr.bf16.mxu0 0
          %1585 = vmatpush2.bf16.msra.mxu0 %v1545
          %1586 = vmatprep.subr.bf16.mxu0 0
          %1587 = vmatpush2.bf16.msra.mxu0 %v1544
          %1588 = vmatprep.subr.bf16.mxu0 0
          %1589 = vmatpush2.bf16.msra.mxu0 %v1543
          %1590 = vmatprep.subr.bf16.mxu0 0
          %1591 = vmatpush2.bf16.msra.mxu0 %v1542
          %1592 = vmatprep.subr.bf16.mxu0 0
          %1593 = vmatpush2.bf16.msra.mxu0 %v1541
          %1594 = vmatprep.subr.bf16.mxu0 0
          %1595 = vmatpush2.bf16.msra.mxu0 %v1540
          %1596 = vmatprep.mubr.bf16.mxu0 %v1428
          %1597 = vmatmul.mubr.bf16.gmra.mxu0 %v1427
          %v1598 = vpop.f32.mrf.mxu0
          %v1599 = vadd.f32 %v1466, %v1598
          %v1600 = vpop.f32.mrf.mxu0
          %v1601 = vpop.f32.mrf.mxu0
          %v1602 = vadd.f32 %v1466, %v1601
          %v1603 = vpop.f32.mrf.mxu0
          %1604 = vdwg.mxu0
          %v1605 = vadd.f32 %v1269, %v1599
          %v1606 = vadd.f32 %v1270, %v1602
          %1607 = vadd.xlane.f32.xlu0 %v1605
          %v1608 = vpop.xlane.xlu0 %1607
          %1609 = vadd.xlane.f32.xlu0 %v1606
          %v1610 = vpop.xlane.xlu0 %1609
          %v1611 = vmul.f32 %v1608, %v1234
          %v1612 = vmul.f32 %v1610, %v1234
          %v1613 = vsub.f32 %v1605, %v1611
          %v1614 = vsub.f32 %v1606, %v1612
          %v1615 = vmul.f32 %v1613, %v1613
          %v1616 = vmul.f32 %v1614, %v1614
          %1617 = vadd.xlane.f32.xlu0 %v1615
          %v1618 = vpop.xlane.xlu0 %1617
          %1619 = vadd.xlane.f32.xlu0 %v1616
          %v1620 = vpop.xlane.xlu0 %1619
          %v1621 = vmul.f32 %v1618, %v1234
          %v1622 = vmul.f32 %v1620, %v1234
          %v1623 = vadd.f32 %v1621, 1e-05
          %v1624 = vadd.f32 %v1622, 1e-05
          %v1625 = vrsqrt.pop %v1623
          %v1626 = vrsqrt.pop %v1624
          %v1627 = vmul.f32 %v1613, %v1625
          %v1628 = vmul.f32 %v1614, %v1626
          %v1629 = vld [vmem:[%s15] sm:$0x1]
          %v1631 = vlaneseq
          %v1632 = vshrl.u32 %v1631, 7
          %v1633 = vsub.s32 0, %v1632
          %v1634 = vrot.slane %v1629, %v1633
          %v1636 = vmul.f32 %v1627, %v1634
          %v1637 = vmul.f32 %v1628, %v1634
          %v1638 = vld [vmem:[%s16] sm:$0x1]
          %v1640 = vlaneseq
          %v1641 = vshrl.u32 %v1640, 7
          %v1642 = vsub.s32 0, %v1641
          %v1643 = vrot.slane %v1638, %v1642
          %v1645 = vadd.f32 %v1636, %v1643
          %v1646 = vadd.f32 %v1637, %v1643
          %1647 = vst [vmem:[%s646] sm:$0xff] %v1645
          %1648 = vst [vmem:[%s646 + $0x8] sm:$0xff] %v1646
        $region96: #{tpu_custom_call.1} parent=87 // pred_fallthru
          _
        %s1649 = sand.u32 %s448, 1
        %s1650 = scalar_lea.sflag [#allocation4], %s1649
        %s1651 = sand.u32 %s448, 1
        %s1652 = smul.addr %s1651, 16
        %s1653 = scalar_lea.vmem [#allocation3], %s1652
        // Predicated region
        $region97: #{tpu_custom_call.1} parent=87 // pred_check
          %p1654 = pneg %p458
        $region98: #{tpu_custom_call.1} parent=87 // pred_check_branch
          %1656 = sbr.rel (%p1654) target = $region100
        $region99: #{tpu_custom_call.1} parent=87 // pred_region
          %s1658 = ssub.s32 256, 256
          %1659 = vsyncadd %s1650, %s1658
          %s1660 = smul.addr %s35, 2
          %s1661 = smul.addr %s1660, 128
          %s1662 = scalar_lea.hbm %s17, %s1661
          %s1663 = sshll.u32 %s1653, 4
          %s1664 = int_to_ptr.vmem [resolvable:$true] %s1663
          %1669 = dma.vmem_to_hbm [thread:$0]  %s1664, 256, %s1662, %s1650, 128, 128, 8
        $region100: #{tpu_custom_call.1} parent=87 // pred_fallthru
          _
      $region88: #{tpu_custom_call.1} parent=5 // pred_fallthru
        _
      %p1670 = scmp.le.s32.totalorder 2, %s26
      // Predicated region
      $region101: #{tpu_custom_call.1} parent=5 // pred_check
        %p1671 = pneg %p1670
      $region102: #{tpu_custom_call.1} parent=5 // pred_check_branch
        %1673 = sbr.rel (%p1671) target = $region104
      $region103: #{tpu_custom_call.1} parent=5 // pred_region
        %s1674 = ssub.s32 %s26, 2
        // Predicated region
        $region105: #{tpu_custom_call.1} parent=103 // pred_check
          %p1675 = pneg %p464
        $region106: #{tpu_custom_call.1} parent=103 // pred_check_branch
          %1677 = sbr.rel (%p1675) target = $region108
        $region107: #{tpu_custom_call.1} parent=103 // pred_region
          %s1678 = sand.u32 %s449, 1
          %s1679 = scalar_lea.sflag [#allocation4], %s1678
          %s1680 = sand.u32 %s449, 1
          %s1681 = smul.addr %s1680, 16
          %s1682 = scalar_lea.vmem [#allocation3], %s1681
          %1683 = dma.done %s1679, 256
        $region108: #{tpu_custom_call.1} parent=103 // pred_fallthru
          _
      $region104: #{tpu_custom_call.1} parent=5 // pred_fallthru
        _
    $region6: #{tpu_custom_call.1} parent=1 // loop_footer
      %s30 = sadd.s32 1, %s26
    $region7: #{tpu_custom_call.1} parent=1 // loop_footer_branch
      %25 = sbr.rel target = $region3
    $region8: #{tpu_custom_call.1} parent=1 // loop_exit
      _
    %1684 = vsyncpa [#allocation4], 1
    %s1685 = scalar_lea.sflag [#allocation4], 1
    %1686 = vsyncpa %s1685, 1

</llo_original>
